<compile_context>
chip_gen: v7x
topology: tpu7x:2x2x1
jax: 0.10.0
libtpu: 0.0.40
codegen_flags: <defaults>
</compile_context>

<pallas_src>
import jax
import jax.numpy as jnp
from jax import lax
from jax.experimental import pallas as pl
from jax.experimental.pallas import tpu as pltpu

# ---------------- model hyper-parameters (small, deterministic) ----------------
B      = 8     # number of graphs per call
N      = 16    # number of graph nodes
F_IN   = 32    # input_feat_dim
H1     = 32    # hidden_dim1
H2     = 16    # hidden_dim2
H3     = 8     # hidden_dim3
ALPHA  = 0.2   # LeakyReLU negative slope
NEG_BIG = -9e15  # mask value from the PyTorch code

# ---------------- packed parameter slab layout (row offsets, col width 32) ------
P_COLS = 32
R_WG   = 0              # w_gat   [F_IN, H1]     rows   0:32 , cols 0:32
R_A1   = R_WG + F_IN    # a1      [H1, 1]        rows  32:64 , cols 0:1
R_A2   = R_A1 + H1      # a2^T    [1, H1]        row   64    , cols 0:32
R_W1   = R_A2 + 8       # w1      [H1, H2]       rows  72:104, cols 0:16
R_W23  = R_W1 + H1      # [w2|w3] [H2, 2*H3]     rows 104:120, cols 0:16
P_ROWS = R_W23 + H2     # 120


def _gat_vae_kernel(params_ref, x_ref, adj_ref, eps_ref, zz_ref, mulv_ref):
    """Forward pass for a whole shard of graphs packed along rows (GN = G*N)."""
    x   = x_ref[...]      # [GN, F_IN]
    adj = adj_ref[...]    # [GN, GN] block-diagonal normalized adjacency

    # static slices of the packed parameter slab (no runtime cost)
    w_gat  = params_ref[R_WG:R_WG + F_IN, 0:H1]        # [F_IN, H1]
    a1     = params_ref[R_A1:R_A1 + H1, 0:1]           # [H1, 1]
    a2_row = params_ref[R_A2:R_A2 + 1, 0:H1]           # [1, H1]
    w1     = params_ref[R_W1:R_W1 + H1, 0:H2]          # [H1, H2]
    w23    = params_ref[R_W23:R_W23 + H2, 0:2 * H3]    # [H2, 2*H3]

    # ---- GraphAttentionLayer (all graphs at once) ----
    wh  = jnp.dot(x, w_gat, preferred_element_type=jnp.float32)      # [GN, H1]
    wh1 = jnp.dot(wh, a1, preferred_element_type=jnp.float32)        # [GN, 1]
    # row form of Wh2 (== (wh @ a2).T) computed directly as a trans-b contraction
    wh2_row = lax.dot_general(a2_row, wh, (((1,), (1,)), ((), ())),
                              preferred_element_type=jnp.float32)    # [1, GN]

    # LeakyReLU + adjacency mask + stable softmax, written as a reuse chain to
    # keep live [GN, GN] temporaries low (vreg pressure).
    e = wh1 + wh2_row                                                # [GN, GN]
    e = jnp.where(e > 0, e, ALPHA * e)                               # LeakyReLU
    e = jnp.where(adj > 0, e, NEG_BIG)                               # mask (kills cross-graph too)
    e = e - jnp.max(e, axis=-1, keepdims=True)                       # stable (self-loop invariant)
    p = jnp.exp(e)                                                   # masked entries -> exactly 0
    att = p * pl.reciprocal(jnp.sum(p, axis=-1, keepdims=True), approx=False)
    attn_wh = jnp.dot(att, wh, preferred_element_type=jnp.float32)   # [GN, H1]

    # ELU (clamp the dead branch so exp never overflows in unselected lanes)
    gc_att = jnp.where(attn_wh > 0, attn_wh,
                       jnp.exp(jnp.minimum(attn_wh, 0.0)) - 1.0)

    # ---- gc1: GraphConvolution(H1 -> H2), ReLU ----
    s1 = jnp.dot(gc_att, w1, preferred_element_type=jnp.float32)     # [GN, H2]
    h1 = jnp.maximum(jnp.dot(adj, s1, preferred_element_type=jnp.float32), 0.0)

    # ---- gc2 / gc3 fused: [mu | logvar] = adj @ (h1 @ [w2|w3]) ----
    t    = jnp.dot(h1, w23, preferred_element_type=jnp.float32)      # [GN, 2*H3]
    mulv = jnp.dot(adj, t, preferred_element_type=jnp.float32)       # [GN, 2*H3]
    mu     = mulv[:, 0:H3]
    logvar = mulv[:, H3:2 * H3]

    # ---- reparameterize (vae_bool=True): z = eps * exp(logvar) + mu ----
    z = eps_ref[...] * jnp.exp(logvar) + mu                          # [GN, H3]

    # ---- InnerProductDecoder: full lane-dense [GN, GN] z @ z^T slab (trans-b) ----
    # Off-diagonal (cross-graph) blocks are discarded in the wrapper.
    zz_ref[...] = lax.dot_general(z, z, (((1,), (1,)), ((), ())),
                                  preferred_element_type=jnp.float32)
    mulv_ref[...] = mulv


def pack_params(w_gat, a_vec, w1, w2, w3):
    """Pack all small parameters into one padded [120, 32] f32 slab."""
    slab = jnp.zeros((P_ROWS, P_COLS), jnp.float32)
    slab = slab.at[R_WG:R_WG + F_IN, 0:H1].set(w_gat)
    slab = slab.at[R_A1:R_A1 + H1, 0:1].set(a_vec[:H1, :])
    slab = slab.at[R_A2:R_A2 + 1, 0:H1].set(a_vec[H1:, :].T)
    slab = slab.at[R_W1:R_W1 + H1, 0:H2].set(w1)
    slab = slab.at[R_W23:R_W23 + H2, 0:2 * H3].set(jnp.concatenate([w2, w3], axis=1))
    return slab


def gat_vae_forward(x, adj, w_gat, a_vec, w1, w2, w3, eps, *, num_shards=1):
    """Single-step batched wrapper.

    num_shards=1 is best on v5e/v6e (one TensorCore); set num_shards=2 on v7x so
    each TensorCore processes half the batch in one parallel grid step.
    """
    b, n, f_in = x.shape
    assert b % num_shards == 0
    g = b // num_shards       # graphs per shard
    gn = g * n                # packed row count per shard (128 with defaults)

    params = pack_params(w_gat, a_vec, w1, w2, w3)

    # pack graphs along rows; build block-diagonal adjacency per shard (XLA side)
    x2   = x.reshape(num_shards, gn, f_in)
    eps2 = eps.reshape(num_shards, gn, H3)
    adj_s = adj.reshape(num_shards, g, n, n)
    eye_g = jnp.eye(g, dtype=adj.dtype)
    adj_bd = (eye_g[None, :, None, :, None] * adj_s[:, :, :, None, :]).reshape(
        num_shards, gn, gn)

    out_shapes = (
        jax.ShapeDtypeStruct((num_shards, gn, gn), jnp.float32),      # z z^T slab (lane-dense)
        jax.ShapeDtypeStruct((num_shards, gn, 2 * H3), jnp.float32),  # [mu | logvar]
    )
    zz, mulv = pl.pallas_call(
        _gat_vae_kernel,
        out_shape=out_shapes,
        grid=(num_shards,),
        in_specs=[
            pl.BlockSpec((P_ROWS, P_COLS), lambda i: (0, 0)),   # params: fetched once
            pl.BlockSpec((None, gn, f_in), lambda i: (i, 0, 0)),
            pl.BlockSpec((None, gn, gn), lambda i: (i, 0, 0)),
            pl.BlockSpec((None, gn, H3), lambda i: (i, 0, 0)),
        ],
        out_specs=(
            pl.BlockSpec((None, gn, gn), lambda i: (i, 0, 0)),
            pl.BlockSpec((None, gn, 2 * H3), lambda i: (i, 0, 0)),
        ),
        compiler_params=pltpu.CompilerParams(dimension_semantics=("parallel",)),
    )(params, x2, adj_bd, eps2)

    # extract per-graph diagonal [N, N] blocks of the z z^T slab
    zz5 = zz.reshape(num_shards, g, n, g, n)
    diag = jnp.diagonal(zz5, axis1=1, axis2=3)               # [s, N, N, g]
    adj_rec = jnp.transpose(diag, (0, 3, 1, 2)).reshape(b, n, n)

    mulv = mulv.reshape(b, n, 2 * H3)
    return adj_rec, mulv[..., :H3], mulv[..., H3:]


# ---------------- deterministic parameter init (matches torch init schemes) ----------------
def xavier_uniform(key, fan_in, fan_out):
    bound = jnp.sqrt(6.0 / (fan_in + fan_out))
    return jax.random.uniform(key, (fan_in, fan_out), jnp.float32, -bound, bound)


def xavier_normal(key, fan_in, fan_out):
    std = jnp.sqrt(2.0 / (fan_in + fan_out))
    return std * jax.random.normal(key, (fan_in, fan_out), jnp.float32)


# ---------------- pure-JAX reference (per-graph, matches the PyTorch module) ----------------
def _reference_forward(x, adj, w_gat, a_vec, w1, w2, w3, eps):
    def one(xg, ag, eg):
        wh = xg @ w_gat
        wh1 = wh @ a_vec[:H1, :]
        wh2 = wh @ a_vec[H1:, :]
        e = wh1 + wh2.T
        e = jnp.where(e > 0, e, ALPHA * e)
        att = jnp.where(ag > 0, e, NEG_BIG)
        att = jax.nn.softmax(att, axis=-1)
        gc_att = jnp.where(att @ wh > 0, att @ wh, jnp.exp(jnp.minimum(att @ wh, 0.0)) - 1.0)
        h1 = jnp.maximum(ag @ (gc_att @ w1), 0.0)
        mu = ag @ (h1 @ w2)
        logvar = ag @ (h1 @ w3)
        z = eg * jnp.exp(logvar) + mu
        return z @ z.T, mu, logvar
    return jax.vmap(one)(x, adj, eps)


if __name__ == "__main__":
    key = jax.random.PRNGKey(0)
    k_x, k_adj, k_wg, k_a, k_w1, k_w2, k_w3, k_eps = jax.random.split(key, 8)

    # inputs: batch of B graphs
    x = jax.random.normal(k_x, (B, N, F_IN), jnp.float32)

    # symmetric 0/1 adjacency with self-loops, then GAE-style symmetric normalization
    # D^-1/2 (A + I) D^-1/2 — what the reference model's torch.spmm consumes.
    r = jax.random.uniform(k_adj, (B, N, N), jnp.float32)
    a_sym = ((r + jnp.swapaxes(r, -1, -2)) > 1.0).astype(jnp.float32)
    a_sym = jnp.maximum(a_sym, jnp.eye(N, dtype=jnp.float32))  # self-loops (softmax invariant)
    d_inv_sqrt = 1.0 / jnp.sqrt(jnp.sum(a_sym, axis=-1))
    adj = a_sym * d_inv_sqrt[..., :, None] * d_inv_sqrt[..., None, :]

    # parameters
    w_gat = xavier_uniform(k_wg, F_IN, H1)     # GraphAttentionLayer.weight
    a_vec = xavier_normal(k_a, 2 * H1, 1)      # GraphAttentionLayer.a
    w1 = xavier_uniform(k_w1, H1, H2)          # gc1.weight
    w2 = xavier_uniform(k_w2, H2, H3)          # gc2.weight
    w3 = xavier_uniform(k_w3, H2, H3)          # gc3.weight

    # reparameterization noise (torch.randn_like) drawn deterministically here
    eps = jax.random.normal(k_eps, (B, N, H3), jnp.float32)

    adj_rec, mu, logvar = jax.block_until_ready(
        gat_vae_forward(x, adj, w_gat, a_vec, w1, w2, w3, eps))

    assert adj_rec.shape == (B, N, N)
    assert mu.shape == (B, N, H3) and logvar.shape == (B, N, H3)
    assert bool(jnp.all(jnp.isfinite(adj_rec)))
    assert bool(jnp.all(jnp.isfinite(mu)))
    assert bool(jnp.all(jnp.isfinite(logvar)))

    # correctness vs. pure-JAX reference (loose tolerance: MXU precision differences)
    ref_adj_rec, ref_mu, ref_logvar = jax.jit(_reference_forward)(
        x, adj, w_gat, a_vec, w1, w2, w3, eps)
    assert bool(jnp.allclose(mu, ref_mu, rtol=1e-1, atol=1e-1))
    assert bool(jnp.allclose(logvar, ref_logvar, rtol=1e-1, atol=1e-1))
    assert bool(jnp.allclose(adj_rec, ref_adj_rec, rtol=1e-1, atol=1e-1))

    print("KERNEL_OK")
</pallas_src>

<mosaic_0001>
module attributes {stable_mosaic.version = 11 : i64} {
  func.func @_gat_vae_kernel(%arg0: i32, %arg1: memref<120x32xf32, #tpu.memory_space<vmem>>, %arg2: memref<1x128x32xf32, #tpu.memory_space<vmem>>, %arg3: memref<1x128x128xf32, #tpu.memory_space<vmem>>, %arg4: memref<1x128x8xf32, #tpu.memory_space<vmem>>, %arg5: memref<1x128x128xf32, #tpu.memory_space<vmem>>, %arg6: memref<1x128x16xf32, #tpu.memory_space<vmem>>) attributes {dimension_semantics = [#tpu.dimension_semantics<parallel>], iteration_bounds = array<i64: 1>, scalar_prefetch = 0 : i64, scratch_operands = 0 : i64, tpu.core_type = #tpu.core_type<tc>, window_params = [{pipeline_mode = #tpu.pipeline_mode<synchronous>, transform_indices = @transform_0, window_bounds = array<i64: 120, 32>}, {transform_indices = @transform_1, window_bounds = array<i64: 1, 128, 32>}, {transform_indices = @transform_2, window_bounds = array<i64: 1, 128, 128>}, {transform_indices = @transform_3, window_bounds = array<i64: 1, 128, 8>}, {transform_indices = @transform_4, window_bounds = array<i64: 1, 128, 128>}, {transform_indices = @transform_5, window_bounds = array<i64: 1, 128, 16>}]} {
    %c0 = arith.constant 0 : index
    %c0_0 = arith.constant 0 : index
    %c0_1 = arith.constant 0 : index
    %0 = vector.load %arg2[%c0, %c0_0, %c0_1] : memref<1x128x32xf32, #tpu.memory_space<vmem>>, vector<1x128x32xf32>
    %1 = vector.shape_cast %0 : vector<1x128x32xf32> to vector<128x32xf32>
    %c0_2 = arith.constant 0 : index
    %c0_3 = arith.constant 0 : index
    %c0_4 = arith.constant 0 : index
    %2 = vector.load %arg3[%c0_2, %c0_3, %c0_4] : memref<1x128x128xf32, #tpu.memory_space<vmem>>, vector<1x128x128xf32>
    %3 = vector.shape_cast %2 : vector<1x128x128xf32> to vector<128x128xf32>
    %c0_5 = arith.constant 0 : index
    %c0_6 = arith.constant 0 : index
    %4 = vector.load %arg1[%c0_5, %c0_6] : memref<120x32xf32, #tpu.memory_space<vmem>>, vector<32x32xf32>
    %c32 = arith.constant 32 : index
    %c0_7 = arith.constant 0 : index
    %5 = vector.load %arg1[%c32, %c0_7] : memref<120x32xf32, #tpu.memory_space<vmem>>, vector<32x1xf32>
    %c64 = arith.constant 64 : index
    %c0_8 = arith.constant 0 : index
    %6 = vector.load %arg1[%c64, %c0_8] : memref<120x32xf32, #tpu.memory_space<vmem>>, vector<1x32xf32>
    %c72 = arith.constant 72 : index
    %c0_9 = arith.constant 0 : index
    %7 = vector.load %arg1[%c72, %c0_9] : memref<120x32xf32, #tpu.memory_space<vmem>>, vector<32x16xf32>
    %c104 = arith.constant 104 : index
    %c0_10 = arith.constant 0 : index
    %8 = vector.load %arg1[%c104, %c0_10] : memref<120x32xf32, #tpu.memory_space<vmem>>, vector<16x16xf32>
    %cst = arith.constant dense<0.000000e+00> : vector<128x32xf32>
    %9 = tpu.matmul %1, %4, %cst {dimension_numbers = #tpu.dot_dimension_numbers<[1], [0], [0], [1], [0, 0, 1, 1], [], []>} : vector<128x32xf32>, vector<32x32xf32>, vector<128x32xf32> -> vector<128x32xf32>
    %cst_11 = arith.constant dense<0.000000e+00> : vector<128x1xf32>
    %10 = tpu.matmul %9, %5, %cst_11 {dimension_numbers = #tpu.dot_dimension_numbers<[1], [0], [0], [1], [0, 0, 1, 1], [], []>} : vector<128x32xf32>, vector<32x1xf32>, vector<128x1xf32> -> vector<128x1xf32>
    %cst_12 = arith.constant dense<0.000000e+00> : vector<1x128xf32>
    %11 = tpu.matmul %6, %9, %cst_12 {dimension_numbers = #tpu.dot_dimension_numbers<[1], [1], [0], [0], [0, 0, 1, 0], [], []>} : vector<1x32xf32>, vector<128x32xf32>, vector<1x128xf32> -> vector<1x128xf32>
    %12 = vector.broadcast %10 : vector<128x1xf32> to vector<128x128xf32>
    %13 = vector.broadcast %11 : vector<1x128xf32> to vector<128x128xf32>
    %14 = arith.addf %12, %13 : vector<128x128xf32>
    %cst_13 = arith.constant 0.000000e+00 : f32
    %15 = vector.broadcast %cst_13 : f32 to vector<128x128xf32>
    %16 = arith.cmpf ogt, %14, %15 : vector<128x128xf32>
    %cst_14 = arith.constant 2.000000e-01 : f32
    %17 = vector.broadcast %cst_14 : f32 to vector<128x128xf32>
    %18 = arith.mulf %17, %14 : vector<128x128xf32>
    %19 = arith.select %16, %14, %18 : vector<128x128xi1>, vector<128x128xf32>
    %cst_15 = arith.constant 0.000000e+00 : f32
    %20 = vector.broadcast %cst_15 : f32 to vector<128x128xf32>
    %21 = arith.cmpf ogt, %3, %20 : vector<128x128xf32>
    %cst_16 = arith.constant -9.000000e+15 : f32
    %22 = vector.broadcast %cst_16 : f32 to vector<128x128xf32>
    %23 = arith.select %21, %19, %22 : vector<128x128xi1>, vector<128x128xf32>
    %cst_17 = arith.constant dense<0xFF800000> : vector<128xf32>
    %24 = vector.multi_reduction <maximumf>, %23, %cst_17 [1] : vector<128x128xf32> to vector<128xf32>
    %25 = vector.shape_cast %24 : vector<128xf32> to vector<128x1xf32>
    %26 = vector.broadcast %25 : vector<128x1xf32> to vector<128x128xf32>
    %27 = arith.subf %23, %26 : vector<128x128xf32>
    %28 = math.exp %27 : vector<128x128xf32>
    %cst_18 = arith.constant dense<0.000000e+00> : vector<128xf32>
    %29 = vector.multi_reduction <add>, %28, %cst_18 [1] : vector<128x128xf32> to vector<128xf32>
    %30 = vector.shape_cast %29 : vector<128xf32> to vector<128x1xf32>
    %31 = tpu.reciprocal %30 : vector<128x1xf32> -> vector<128x1xf32>
    %32 = vector.broadcast %31 : vector<128x1xf32> to vector<128x128xf32>
    %33 = arith.mulf %28, %32 : vector<128x128xf32>
    %cst_19 = arith.constant dense<0.000000e+00> : vector<128x32xf32>
    %34 = tpu.matmul %33, %9, %cst_19 {dimension_numbers = #tpu.dot_dimension_numbers<[1], [0], [0], [1], [0, 0, 1, 1], [], []>} : vector<128x128xf32>, vector<128x32xf32>, vector<128x32xf32> -> vector<128x32xf32>
    %cst_20 = arith.constant 0.000000e+00 : f32
    %35 = vector.broadcast %cst_20 : f32 to vector<128x32xf32>
    %36 = arith.cmpf ogt, %34, %35 : vector<128x32xf32>
    %cst_21 = arith.constant 0.000000e+00 : f32
    %37 = vector.broadcast %cst_21 : f32 to vector<128x32xf32>
    %38 = arith.minimumf %34, %37 : vector<128x32xf32>
    %39 = math.exp %38 : vector<128x32xf32>
    %cst_22 = arith.constant 1.000000e+00 : f32
    %40 = vector.broadcast %cst_22 : f32 to vector<128x32xf32>
    %41 = arith.subf %39, %40 : vector<128x32xf32>
    %42 = arith.select %36, %34, %41 : vector<128x32xi1>, vector<128x32xf32>
    %cst_23 = arith.constant dense<0.000000e+00> : vector<128x16xf32>
    %43 = tpu.matmul %42, %7, %cst_23 {dimension_numbers = #tpu.dot_dimension_numbers<[1], [0], [0], [1], [0, 0, 1, 1], [], []>} : vector<128x32xf32>, vector<32x16xf32>, vector<128x16xf32> -> vector<128x16xf32>
    %cst_24 = arith.constant dense<0.000000e+00> : vector<128x16xf32>
    %44 = tpu.matmul %3, %43, %cst_24 {dimension_numbers = #tpu.dot_dimension_numbers<[1], [0], [0], [1], [0, 0, 1, 1], [], []>} : vector<128x128xf32>, vector<128x16xf32>, vector<128x16xf32> -> vector<128x16xf32>
    %cst_25 = arith.constant 0.000000e+00 : f32
    %45 = vector.broadcast %cst_25 : f32 to vector<128x16xf32>
    %46 = arith.maximumf %44, %45 : vector<128x16xf32>
    %cst_26 = arith.constant dense<0.000000e+00> : vector<128x16xf32>
    %47 = tpu.matmul %46, %8, %cst_26 {dimension_numbers = #tpu.dot_dimension_numbers<[1], [0], [0], [1], [0, 0, 1, 1], [], []>} : vector<128x16xf32>, vector<16x16xf32>, vector<128x16xf32> -> vector<128x16xf32>
    %cst_27 = arith.constant dense<0.000000e+00> : vector<128x16xf32>
    %48 = tpu.matmul %3, %47, %cst_27 {dimension_numbers = #tpu.dot_dimension_numbers<[1], [0], [0], [1], [0, 0, 1, 1], [], []>} : vector<128x128xf32>, vector<128x16xf32>, vector<128x16xf32> -> vector<128x16xf32>
    %49 = vector.extract_strided_slice %48 {offsets = [0, 0], sizes = [128, 8], strides = [1, 1]} : vector<128x16xf32> to vector<128x8xf32>
    %50 = vector.extract_strided_slice %48 {offsets = [0, 8], sizes = [128, 8], strides = [1, 1]} : vector<128x16xf32> to vector<128x8xf32>
    %c0_28 = arith.constant 0 : index
    %c0_29 = arith.constant 0 : index
    %c0_30 = arith.constant 0 : index
    %51 = vector.load %arg4[%c0_28, %c0_29, %c0_30] : memref<1x128x8xf32, #tpu.memory_space<vmem>>, vector<1x128x8xf32>
    %52 = vector.shape_cast %51 : vector<1x128x8xf32> to vector<128x8xf32>
    %53 = math.exp %50 : vector<128x8xf32>
    %54 = arith.mulf %52, %53 : vector<128x8xf32>
    %55 = arith.addf %54, %49 : vector<128x8xf32>
    %cst_31 = arith.constant dense<0.000000e+00> : vector<128x128xf32>
    %56 = tpu.matmul %55, %55, %cst_31 {dimension_numbers = #tpu.dot_dimension_numbers<[1], [1], [0], [0], [0, 0, 1, 0], [], []>} : vector<128x8xf32>, vector<128x8xf32>, vector<128x128xf32> -> vector<128x128xf32>
    %c0_32 = arith.constant 0 : index
    %c0_33 = arith.constant 0 : index
    %c0_34 = arith.constant 0 : index
    %57 = vector.load %arg5[%c0_32, %c0_33, %c0_34] : memref<1x128x128xf32, #tpu.memory_space<vmem>>, vector<1x128x128xf32>
    %58 = vector.shape_cast %57 : vector<1x128x128xf32> to vector<128x128xf32>
    %59 = vector.shape_cast %56 : vector<128x128xf32> to vector<1x128x128xf32>
    tpu.vector_store %arg5[%c0_32, %c0_33, %c0_34], %59 {strides = array<i32>} : memref<1x128x128xf32, #tpu.memory_space<vmem>>, vector<1x128x128xf32>,
    %c0_35 = arith.constant 0 : index
    %c0_36 = arith.constant 0 : index
    %c0_37 = arith.constant 0 : index
    %60 = vector.load %arg6[%c0_35, %c0_36, %c0_37] : memref<1x128x16xf32, #tpu.memory_space<vmem>>, vector<1x128x16xf32>
    %61 = vector.shape_cast %60 : vector<1x128x16xf32> to vector<128x16xf32>
    %62 = vector.shape_cast %48 : vector<128x16xf32> to vector<1x128x16xf32>
    tpu.vector_store %arg6[%c0_35, %c0_36, %c0_37], %62 {strides = array<i32>} : memref<1x128x16xf32, #tpu.memory_space<vmem>>, vector<1x128x16xf32>,
    return
  }
  func.func @transform_0(%arg0: i32) -> (i32, i32) {
    %c0_i32 = arith.constant 0 : i32
    %c0_i32_0 = arith.constant 0 : i32
    %c0_i32_1 = arith.constant 0 : i32
    return %c0_i32, %c0_i32_0 : i32, i32
  }
  func.func @transform_1(%arg0: i32) -> (i32, i32, i32) {
    %c0_i32 = arith.constant 0 : i32
    %c0_i32_0 = arith.constant 0 : i32
    %c0_i32_1 = arith.constant 0 : i32
    return %arg0, %c0_i32, %c0_i32_0 : i32, i32, i32
  }
  func.func @transform_2(%arg0: i32) -> (i32, i32, i32) {
    %c0_i32 = arith.constant 0 : i32
    %c0_i32_0 = arith.constant 0 : i32
    %c0_i32_1 = arith.constant 0 : i32
    return %arg0, %c0_i32, %c0_i32_0 : i32, i32, i32
  }
  func.func @transform_3(%arg0: i32) -> (i32, i32, i32) {
    %c0_i32 = arith.constant 0 : i32
    %c0_i32_0 = arith.constant 0 : i32
    %c0_i32_1 = arith.constant 0 : i32
    return %arg0, %c0_i32, %c0_i32_0 : i32, i32, i32
  }
  func.func @transform_4(%arg0: i32) -> (i32, i32, i32) {
    %c0_i32 = arith.constant 0 : i32
    %c0_i32_0 = arith.constant 0 : i32
    %c0_i32_1 = arith.constant 0 : i32
    return %arg0, %c0_i32, %c0_i32_0 : i32, i32, i32
  }
  func.func @transform_5(%arg0: i32) -> (i32, i32, i32) {
    %c0_i32 = arith.constant 0 : i32
    %c0_i32_0 = arith.constant 0 : i32
    %c0_i32_1 = arith.constant 0 : i32
    return %arg0, %c0_i32, %c0_i32_0 : i32, i32, i32
  }
}

</mosaic_0001>

<llo_original>
// kernel: tpu_custom_call.1
$region0: #{tpu_custom_call.1}
  #allocation0 [shape = 'u32[]', space=smem, size = 0x4, offset = 0x4, fixed_abs, tag = 'smem constant byte address 0x4 - core index']
  #allocation1 [shape = 'u32[144,128]{1,0:T(1,128)}', space=vmem, size = 0x12000, scoped, tag = 'internal scratch']
  %s0 = inlined_call_operand.vmem [shape: f32[120,32], index: 0, kind: input, shape index: {}]
  %s1 = inlined_call_operand.vmem [shape: f32[1,128,32], index: 1, kind: input, shape index: {}]
  %s2 = inlined_call_operand.vmem [shape: f32[1,128,128], index: 2, kind: input, shape index: {}]
  %s3 = inlined_call_operand.vmem [shape: f32[1,128,8], index: 3, kind: input, shape index: {}]
  %s4 = inlined_call_operand.hbm [shape: f32[1,128,128], index: 4, kind: output, shape index: {0}]
  %s5 = inlined_call_operand.vmem [shape: f32[1,128,16], index: 5, kind: output, shape index: {1}]
  %6 = xla_tuple %s4, %s5
  %s7 = sld [smem:[#allocation0]]
  $region34: #{tpu_custom_call.1} parent=0
    _
  %s9 = ssub.s32 1, %s7
  %s10 = scalar_select 0, %s9, %s7
  $region1: #{tpu_custom_call.1} parent=0
    #allocation2 [shape = 'u8[65536]{0}', space=vmem, size = 0x10000, scoped, tag = 'output window, operand 0, single buffered']
    #allocation3 [shape = 's32[1]{0}', space=sflag, size = 0x4, scoped, tag = 'scoped memory for tpu_custom_call.1']
    %11 = vsyncpa [#allocation3], 0
    // Predicated region
    $region2: #{tpu_custom_call.1} parent=1 // pred_check
      _
    $region3: #{tpu_custom_call.1} parent=1 // pred_check_branch
      %13 = sbr.rel (0) target = $region5
    $region4: #{tpu_custom_call.1} parent=1 // pred_region
      _
    $region5: #{tpu_custom_call.1} parent=1 // pred_fallthru
      _
    // Predicated region
    $region6: #{tpu_custom_call.1} parent=1 // pred_check
      _
    $region7: #{tpu_custom_call.1} parent=1 // pred_check_branch
      %15 = sbr.rel (0) target = $region9
    $region8: #{tpu_custom_call.1} parent=1 // pred_region
      _
    $region9: #{tpu_custom_call.1} parent=1 // pred_fallthru
      _
    // Predicated region
    $region10: #{tpu_custom_call.1} parent=1 // pred_check
      _
    $region11: #{tpu_custom_call.1} parent=1 // pred_check_branch
      %17 = sbr.rel (0) target = $region13
    $region12: #{tpu_custom_call.1} parent=1 // pred_region
      _
    $region13: #{tpu_custom_call.1} parent=1 // pred_fallthru
      _
    // Predicated region
    $region14: #{tpu_custom_call.1} parent=1 // pred_check
      _
    $region15: #{tpu_custom_call.1} parent=1 // pred_check_branch
      %19 = sbr.rel (0) target = $region17
    $region16: #{tpu_custom_call.1} parent=1 // pred_region
      _
    $region17: #{tpu_custom_call.1} parent=1 // pred_fallthru
      _
    %v20 = vld [vmem:[%s1] sm:$0xff]
    %v21 = vld [vmem:[%s1 + $0x8] sm:$0xff]
    %v22 = vld [vmem:[%s1 + $0x10] sm:$0xff]
    %v23 = vld [vmem:[%s1 + $0x18] sm:$0xff]
    %v24 = vld [vmem:[%s1 + $0x20] sm:$0xff]
    %v25 = vld [vmem:[%s1 + $0x28] sm:$0xff]
    %v26 = vld [vmem:[%s1 + $0x30] sm:$0xff]
    %v27 = vld [vmem:[%s1 + $0x38] sm:$0xff]
    %v28 = vld [vmem:[%s1 + $0x40] sm:$0xff]
    %v29 = vld [vmem:[%s1 + $0x48] sm:$0xff]
    %v30 = vld [vmem:[%s1 + $0x50] sm:$0xff]
    %v31 = vld [vmem:[%s1 + $0x58] sm:$0xff]
    %v32 = vld [vmem:[%s1 + $0x60] sm:$0xff]
    %v33 = vld [vmem:[%s1 + $0x68] sm:$0xff]
    %v34 = vld [vmem:[%s1 + $0x70] sm:$0xff]
    %v35 = vld [vmem:[%s1 + $0x78] sm:$0xff]
    %v36 = vld [vmem:[%s2] sm:$0xff]
    %v37 = vld [vmem:[%s2 + $0x8] sm:$0xff]
    %v38 = vld [vmem:[%s2 + $0x10] sm:$0xff]
    %v39 = vld [vmem:[%s2 + $0x18] sm:$0xff]
    %v40 = vld [vmem:[%s2 + $0x20] sm:$0xff]
    %v41 = vld [vmem:[%s2 + $0x28] sm:$0xff]
    %v42 = vld [vmem:[%s2 + $0x30] sm:$0xff]
    %v43 = vld [vmem:[%s2 + $0x38] sm:$0xff]
    %v44 = vld [vmem:[%s2 + $0x40] sm:$0xff]
    %v45 = vld [vmem:[%s2 + $0x48] sm:$0xff]
    %v46 = vld [vmem:[%s2 + $0x50] sm:$0xff]
    %v47 = vld [vmem:[%s2 + $0x58] sm:$0xff]
    %v48 = vld [vmem:[%s2 + $0x60] sm:$0xff]
    %v49 = vld [vmem:[%s2 + $0x68] sm:$0xff]
    %v50 = vld [vmem:[%s2 + $0x70] sm:$0xff]
    %v51 = vld [vmem:[%s2 + $0x78] sm:$0xff]
    %v52 = vld [vmem:[%s0] sm:$0xff]
    %v53 = vld [vmem:[%s0 + $0x8] sm:$0xff]
    %v54 = vld [vmem:[%s0 + $0x10] sm:$0xff]
    %v55 = vld [vmem:[%s0 + $0x18] sm:$0xff]
    %v56 = vld [vmem:[%s0 + $0x20] sm:$0xff]
    %v57 = vld [vmem:[%s0 + $0x28] sm:$0xff]
    %v58 = vld [vmem:[%s0 + $0x30] sm:$0xff]
    %v59 = vld [vmem:[%s0 + $0x38] sm:$0xff]
    %v60 = vld [vmem:[%s0 + $0x40] sm:$0x1]
    %v61 = vld [vmem:[%s0 + $0x48] sm:$0xff]
    %v62 = vld [vmem:[%s0 + $0x50] sm:$0xff]
    %v63 = vld [vmem:[%s0 + $0x58] sm:$0xff]
    %v64 = vld [vmem:[%s0 + $0x60] sm:$0xff]
    %v65 = vld [vmem:[%s0 + $0x68] sm:$0xff]
    %v66 = vld [vmem:[%s0 + $0x70] sm:$0xff]
    %vm67 = vcmask 261120
    %v69 = vsel %vm67, %v20, 0
    %v72 = vsel %vm67, %v21, 0
    %v75 = vsel %vm67, %v22, 0
    %v78 = vsel %vm67, %v23, 0
    %v81 = vsel %vm67, %v24, 0
    %v84 = vsel %vm67, %v25, 0
    %v87 = vsel %vm67, %v26, 0
    %v90 = vsel %vm67, %v27, 0
    %v93 = vsel %vm67, %v28, 0
    %v96 = vsel %vm67, %v29, 0
    %v99 = vsel %vm67, %v30, 0
    %v102 = vsel %vm67, %v31, 0
    %v105 = vsel %vm67, %v32, 0
    %v108 = vsel %vm67, %v33, 0
    %v111 = vsel %vm67, %v34, 0
    %v114 = vsel %vm67, %v35, 0
    %116 = vmatprep.subr.mxu0 0.0
    %117 = vmatpush1.msra.mxu0 %v52
    %118 = vmatprep.subr.mxu0 0.0
    %119 = vmatpush1.msra.mxu0 %v53
    %120 = vmatprep.subr.mxu0 0.0
    %121 = vmatpush1.msra.mxu0 %v54
    %122 = vmatprep.subr.mxu0 0.0
    %123 = vmatpush1.msra.mxu0 %v55
    %124 = vmatprep.subr.mxu0 0.0
    %125 = vmatpush1.msra.mxu0 0.0
    %126 = vmatprep.subr.mxu0 0.0
    %127 = vmatpush1.msra.mxu0 0.0
    %128 = vmatprep.subr.mxu0 0.0
    %129 = vmatpush1.msra.mxu0 0.0
    %130 = vmatprep.subr.mxu0 0.0
    %131 = vmatpush1.msra.mxu0 0.0
    %132 = vmatprep.subr.mxu0 0.0
    %133 = vmatpush1.msra.mxu0 0.0
    %134 = vmatprep.subr.mxu0 0.0
    %135 = vmatpush1.msra.mxu0 0.0
    %136 = vmatprep.subr.mxu0 0.0
    %137 = vmatpush1.msra.mxu0 0.0
    %138 = vmatprep.subr.mxu0 0.0
    %139 = vmatpush1.msra.mxu0 0.0
    %140 = vmatprep.subr.mxu0 0.0
    %141 = vmatpush1.msra.mxu0 0.0
    %142 = vmatprep.subr.mxu0 0.0
    %143 = vmatpush1.msra.mxu0 0.0
    %144 = vmatprep.subr.mxu0 0.0
    %145 = vmatpush1.msra.mxu0 0.0
    %146 = vmatprep.subr.mxu0 0.0
    %147 = vmatpush1.msra.mxu0 0.0
    %148 = vmatprep.subr.mxu0 0.0
    %149 = vmatpush1.msra.mxu0 0.0
    %150 = vmatprep.subr.mxu0 0.0
    %151 = vmatpush1.msra.mxu0 0.0
    %152 = vmatprep.subr.mxu0 0.0
    %153 = vmatpush1.msra.mxu0 0.0
    %154 = vmatprep.subr.mxu0 0.0
    %155 = vmatpush1.msra.mxu0 0.0
    %156 = vmatprep.subr.mxu0 0.0
    %157 = vmatpush1.msra.mxu0 0.0
    %158 = vmatprep.subr.mxu0 0.0
    %159 = vmatpush1.msra.mxu0 0.0
    %160 = vmatprep.subr.mxu0 0.0
    %161 = vmatpush1.msra.mxu0 0.0
    %162 = vmatprep.subr.mxu0 0.0
    %163 = vmatpush1.msra.mxu0 0.0
    %164 = vmatprep.subr.mxu0 0.0
    %165 = vmatpush1.msra.mxu0 0.0
    %166 = vmatprep.subr.mxu0 0.0
    %167 = vmatpush1.msra.mxu0 0.0
    %168 = vmatprep.subr.mxu0 0.0
    %169 = vmatpush1.msra.mxu0 0.0
    %170 = vmatprep.subr.mxu0 0.0
    %171 = vmatpush1.msra.mxu0 0.0
    %172 = vmatprep.subr.mxu0 0.0
    %173 = vmatpush1.msra.mxu0 0.0
    %174 = vmatprep.subr.mxu0 0.0
    %175 = vmatpush1.msra.mxu0 0.0
    %176 = vmatprep.subr.mxu0 0.0
    %177 = vmatpush1.msra.mxu0 0.0
    %178 = vmatprep.subr.mxu0 0.0
    %179 = vmatpush1.msra.mxu0 0.0
    %180 = vmatprep.mubr.f32.mxu0 0.0
    %181 = vmatmul.mubr.f32.gmra.mrb[0].mxu0 %v69
    %v182 = vpop.f32.mrb[0].mxu0
    %v183 = vadd.f32 0.0, %v182
    %v184 = vpop.f32.mrb[0].mxu0
    %185 = vmatprep.mubr.f32.mxu0 0.0
    %186 = vmatmul.mubr.f32.gmra.mrb[0].mxu0 %v72
    %v187 = vpop.f32.mrb[0].mxu0
    %v188 = vadd.f32 0.0, %v187
    %v189 = vpop.f32.mrb[0].mxu0
    %190 = vmatprep.mubr.f32.mxu0 0.0
    %191 = vmatmul.mubr.f32.gmra.mrb[0].mxu0 %v75
    %v192 = vpop.f32.mrb[0].mxu0
    %v193 = vadd.f32 0.0, %v192
    %v194 = vpop.f32.mrb[0].mxu0
    %195 = vmatprep.mubr.f32.mxu0 0.0
    %196 = vmatmul.mubr.f32.gmra.mrb[0].mxu0 %v78
    %v197 = vpop.f32.mrb[0].mxu0
    %v198 = vadd.f32 0.0, %v197
    %v199 = vpop.f32.mrb[0].mxu0
    %200 = vmatprep.mubr.f32.mxu0 0.0
    %201 = vmatmul.mubr.f32.gmra.mrb[0].mxu0 %v81
    %v202 = vpop.f32.mrb[0].mxu0
    %v203 = vadd.f32 0.0, %v202
    %v204 = vpop.f32.mrb[0].mxu0
    %205 = vmatprep.mubr.f32.mxu0 0.0
    %206 = vmatmul.mubr.f32.gmra.mrb[0].mxu0 %v84
    %v207 = vpop.f32.mrb[0].mxu0
    %v208 = vadd.f32 0.0, %v207
    %v209 = vpop.f32.mrb[0].mxu0
    %210 = vmatprep.mubr.f32.mxu0 0.0
    %211 = vmatmul.mubr.f32.gmra.mrb[0].mxu0 %v87
    %v212 = vpop.f32.mrb[0].mxu0
    %v213 = vadd.f32 0.0, %v212
    %v214 = vpop.f32.mrb[0].mxu0
    %215 = vmatprep.mubr.f32.mxu0 0.0
    %216 = vmatmul.mubr.f32.gmra.mrb[0].mxu0 %v90
    %v217 = vpop.f32.mrb[0].mxu0
    %v218 = vadd.f32 0.0, %v217
    %v219 = vpop.f32.mrb[0].mxu0
    %220 = vmatprep.mubr.f32.mxu0 0.0
    %221 = vmatmul.mubr.f32.gmra.mrb[0].mxu0 %v93
    %v222 = vpop.f32.mrb[0].mxu0
    %v223 = vadd.f32 0.0, %v222
    %v224 = vpop.f32.mrb[0].mxu0
    %225 = vmatprep.mubr.f32.mxu0 0.0
    %226 = vmatmul.mubr.f32.gmra.mrb[0].mxu0 %v96
    %v227 = vpop.f32.mrb[0].mxu0
    %v228 = vadd.f32 0.0, %v227
    %v229 = vpop.f32.mrb[0].mxu0
    %230 = vmatprep.mubr.f32.mxu0 0.0
    %231 = vmatmul.mubr.f32.gmra.mrb[0].mxu0 %v99
    %v232 = vpop.f32.mrb[0].mxu0
    %v233 = vadd.f32 0.0, %v232
    %v234 = vpop.f32.mrb[0].mxu0
    %235 = vmatprep.mubr.f32.mxu0 0.0
    %236 = vmatmul.mubr.f32.gmra.mrb[0].mxu0 %v102
    %v237 = vpop.f32.mrb[0].mxu0
    %v238 = vadd.f32 0.0, %v237
    %v239 = vpop.f32.mrb[0].mxu0
    %240 = vmatprep.mubr.f32.mxu0 0.0
    %241 = vmatmul.mubr.f32.gmra.mrb[0].mxu0 %v105
    %v242 = vpop.f32.mrb[0].mxu0
    %v243 = vadd.f32 0.0, %v242
    %v244 = vpop.f32.mrb[0].mxu0
    %245 = vmatprep.mubr.f32.mxu0 0.0
    %246 = vmatmul.mubr.f32.gmra.mrb[0].mxu0 %v108
    %v247 = vpop.f32.mrb[0].mxu0
    %v248 = vadd.f32 0.0, %v247
    %v249 = vpop.f32.mrb[0].mxu0
    %250 = vmatprep.mubr.f32.mxu0 0.0
    %251 = vmatmul.mubr.f32.gmra.mrb[0].mxu0 %v111
    %v252 = vpop.f32.mrb[0].mxu0
    %v253 = vadd.f32 0.0, %v252
    %v254 = vpop.f32.mrb[0].mxu0
    %255 = vmatprep.mubr.f32.mxu0 0.0
    %256 = vmatmul.mubr.f32.gmra.mrb[0].mxu0 %v114
    %v257 = vpop.f32.mrb[0].mxu0
    %v258 = vadd.f32 0.0, %v257
    %v259 = vpop.f32.mrb[0].mxu0
    %260 = vdwg.mxu0
    %v262 = vsel %vm67, %v183, 0
    %v265 = vsel %vm67, %v188, 0
    %v268 = vsel %vm67, %v193, 0
    %v271 = vsel %vm67, %v198, 0
    %v274 = vsel %vm67, %v203, 0
    %v277 = vsel %vm67, %v208, 0
    %v280 = vsel %vm67, %v213, 0
    %v283 = vsel %vm67, %v218, 0
    %v286 = vsel %vm67, %v223, 0
    %v289 = vsel %vm67, %v228, 0
    %v292 = vsel %vm67, %v233, 0
    %v295 = vsel %vm67, %v238, 0
    %v298 = vsel %vm67, %v243, 0
    %v301 = vsel %vm67, %v248, 0
    %v304 = vsel %vm67, %v253, 0
    %v307 = vsel %vm67, %v258, 0
    %309 = vmatprep.subr.mxu0 0.0
    %310 = vmatpush1.msra.mxu0 %v56
    %311 = vmatprep.subr.mxu0 0.0
    %312 = vmatpush1.msra.mxu0 %v57
    %313 = vmatprep.subr.mxu0 0.0
    %314 = vmatpush1.msra.mxu0 %v58
    %315 = vmatprep.subr.mxu0 0.0
    %316 = vmatpush1.msra.mxu0 %v59
    %317 = vmatprep.subr.mxu0 0.0
    %318 = vmatpush1.msra.mxu0 0.0
    %319 = vmatprep.subr.mxu0 0.0
    %320 = vmatpush1.msra.mxu0 0.0
    %321 = vmatprep.subr.mxu0 0.0
    %322 = vmatpush1.msra.mxu0 0.0
    %323 = vmatprep.subr.mxu0 0.0
    %324 = vmatpush1.msra.mxu0 0.0
    %325 = vmatprep.subr.mxu0 0.0
    %326 = vmatpush1.msra.mxu0 0.0
    %327 = vmatprep.subr.mxu0 0.0
    %328 = vmatpush1.msra.mxu0 0.0
    %329 = vmatprep.subr.mxu0 0.0
    %330 = vmatpush1.msra.mxu0 0.0
    %331 = vmatprep.subr.mxu0 0.0
    %332 = vmatpush1.msra.mxu0 0.0
    %333 = vmatprep.subr.mxu0 0.0
    %334 = vmatpush1.msra.mxu0 0.0
    %335 = vmatprep.subr.mxu0 0.0
    %336 = vmatpush1.msra.mxu0 0.0
    %337 = vmatprep.subr.mxu0 0.0
    %338 = vmatpush1.msra.mxu0 0.0
    %339 = vmatprep.subr.mxu0 0.0
    %340 = vmatpush1.msra.mxu0 0.0
    %341 = vmatprep.subr.mxu0 0.0
    %342 = vmatpush1.msra.mxu0 0.0
    %343 = vmatprep.subr.mxu0 0.0
    %344 = vmatpush1.msra.mxu0 0.0
    %345 = vmatprep.subr.mxu0 0.0
    %346 = vmatpush1.msra.mxu0 0.0
    %347 = vmatprep.subr.mxu0 0.0
    %348 = vmatpush1.msra.mxu0 0.0
    %349 = vmatprep.subr.mxu0 0.0
    %350 = vmatpush1.msra.mxu0 0.0
    %351 = vmatprep.subr.mxu0 0.0
    %352 = vmatpush1.msra.mxu0 0.0
    %353 = vmatprep.subr.mxu0 0.0
    %354 = vmatpush1.msra.mxu0 0.0
    %355 = vmatprep.subr.mxu0 0.0
    %356 = vmatpush1.msra.mxu0 0.0
    %357 = vmatprep.subr.mxu0 0.0
    %358 = vmatpush1.msra.mxu0 0.0
    %359 = vmatprep.subr.mxu0 0.0
    %360 = vmatpush1.msra.mxu0 0.0
    %361 = vmatprep.subr.mxu0 0.0
    %362 = vmatpush1.msra.mxu0 0.0
    %363 = vmatprep.subr.mxu0 0.0
    %364 = vmatpush1.msra.mxu0 0.0
    %365 = vmatprep.subr.mxu0 0.0
    %366 = vmatpush1.msra.mxu0 0.0
    %367 = vmatprep.subr.mxu0 0.0
    %368 = vmatpush1.msra.mxu0 0.0
    %369 = vmatprep.subr.mxu0 0.0
    %370 = vmatpush1.msra.mxu0 0.0
    %371 = vmatprep.subr.mxu0 0.0
    %372 = vmatpush1.msra.mxu0 0.0
    %373 = vmatprep.mubr.f32.mxu0 0.0
    %374 = vmatmul.mubr.f32.gmra.mrb[0].mxu0 %v262
    %v375 = vpop.f32.mrb[0].mxu0
    %v376 = vadd.f32 0.0, %v375
    %v377 = vpop.f32.mrb[0].mxu0
    %378 = vmatprep.mubr.f32.mxu0 0.0
    %379 = vmatmul.mubr.f32.gmra.mrb[0].mxu0 %v265
    %v380 = vpop.f32.mrb[0].mxu0
    %v381 = vadd.f32 0.0, %v380
    %v382 = vpop.f32.mrb[0].mxu0
    %383 = vmatprep.mubr.f32.mxu0 0.0
    %384 = vmatmul.mubr.f32.gmra.mrb[0].mxu0 %v268
    %v385 = vpop.f32.mrb[0].mxu0
    %v386 = vadd.f32 0.0, %v385
    %v387 = vpop.f32.mrb[0].mxu0
    %388 = vmatprep.mubr.f32.mxu0 0.0
    %389 = vmatmul.mubr.f32.gmra.mrb[0].mxu0 %v271
    %v390 = vpop.f32.mrb[0].mxu0
    %v391 = vadd.f32 0.0, %v390
    %v392 = vpop.f32.mrb[0].mxu0
    %393 = vmatprep.mubr.f32.mxu0 0.0
    %394 = vmatmul.mubr.f32.gmra.mrb[0].mxu0 %v274
    %v395 = vpop.f32.mrb[0].mxu0
    %v396 = vadd.f32 0.0, %v395
    %v397 = vpop.f32.mrb[0].mxu0
    %398 = vmatprep.mubr.f32.mxu0 0.0
    %399 = vmatmul.mubr.f32.gmra.mrb[0].mxu0 %v277
    %v400 = vpop.f32.mrb[0].mxu0
    %v401 = vadd.f32 0.0, %v400
    %v402 = vpop.f32.mrb[0].mxu0
    %403 = vmatprep.mubr.f32.mxu0 0.0
    %404 = vmatmul.mubr.f32.gmra.mrb[0].mxu0 %v280
    %v405 = vpop.f32.mrb[0].mxu0
    %v406 = vadd.f32 0.0, %v405
    %v407 = vpop.f32.mrb[0].mxu0
    %408 = vmatprep.mubr.f32.mxu0 0.0
    %409 = vmatmul.mubr.f32.gmra.mrb[0].mxu0 %v283
    %v410 = vpop.f32.mrb[0].mxu0
    %v411 = vadd.f32 0.0, %v410
    %v412 = vpop.f32.mrb[0].mxu0
    %413 = vmatprep.mubr.f32.mxu0 0.0
    %414 = vmatmul.mubr.f32.gmra.mrb[0].mxu0 %v286
    %v415 = vpop.f32.mrb[0].mxu0
    %v416 = vadd.f32 0.0, %v415
    %v417 = vpop.f32.mrb[0].mxu0
    %418 = vmatprep.mubr.f32.mxu0 0.0
    %419 = vmatmul.mubr.f32.gmra.mrb[0].mxu0 %v289
    %v420 = vpop.f32.mrb[0].mxu0
    %v421 = vadd.f32 0.0, %v420
    %v422 = vpop.f32.mrb[0].mxu0
    %423 = vmatprep.mubr.f32.mxu0 0.0
    %424 = vmatmul.mubr.f32.gmra.mrb[0].mxu0 %v292
    %v425 = vpop.f32.mrb[0].mxu0
    %v426 = vadd.f32 0.0, %v425
    %v427 = vpop.f32.mrb[0].mxu0
    %428 = vmatprep.mubr.f32.mxu0 0.0
    %429 = vmatmul.mubr.f32.gmra.mrb[0].mxu0 %v295
    %v430 = vpop.f32.mrb[0].mxu0
    %v431 = vadd.f32 0.0, %v430
    %v432 = vpop.f32.mrb[0].mxu0
    %433 = vmatprep.mubr.f32.mxu0 0.0
    %434 = vmatmul.mubr.f32.gmra.mrb[0].mxu0 %v298
    %v435 = vpop.f32.mrb[0].mxu0
    %v436 = vadd.f32 0.0, %v435
    %v437 = vpop.f32.mrb[0].mxu0
    %438 = vmatprep.mubr.f32.mxu0 0.0
    %439 = vmatmul.mubr.f32.gmra.mrb[0].mxu0 %v301
    %v440 = vpop.f32.mrb[0].mxu0
    %v441 = vadd.f32 0.0, %v440
    %v442 = vpop.f32.mrb[0].mxu0
    %443 = vmatprep.mubr.f32.mxu0 0.0
    %444 = vmatmul.mubr.f32.gmra.mrb[0].mxu0 %v304
    %v445 = vpop.f32.mrb[0].mxu0
    %v446 = vadd.f32 0.0, %v445
    %v447 = vpop.f32.mrb[0].mxu0
    %448 = vmatprep.mubr.f32.mxu0 0.0
    %449 = vmatmul.mubr.f32.gmra.mrb[0].mxu0 %v307
    %v450 = vpop.f32.mrb[0].mxu0
    %v451 = vadd.f32 0.0, %v450
    %v452 = vpop.f32.mrb[0].mxu0
    %453 = vdwg.mxu0
    %v455 = vsel %vm67, %v60, 0
    %457 = vmatprep.subr.mxu0 0.0
    %458 = vmatpush1.xpose.msra.mxu0 %v262
    %459 = vmatprep.subr.mxu0 0.0
    %460 = vmatpush1.xpose.msra.mxu0 %v265
    %461 = vmatprep.subr.mxu0 0.0
    %462 = vmatpush1.xpose.msra.mxu0 %v268
    %463 = vmatprep.subr.mxu0 0.0
    %464 = vmatpush1.xpose.msra.mxu0 %v271
    %465 = vmatprep.subr.mxu0 0.0
    %466 = vmatpush1.xpose.msra.mxu0 %v274
    %467 = vmatprep.subr.mxu0 0.0
    %468 = vmatpush1.xpose.msra.mxu0 %v277
    %469 = vmatprep.subr.mxu0 0.0
    %470 = vmatpush1.xpose.msra.mxu0 %v280
    %471 = vmatprep.subr.mxu0 0.0
    %472 = vmatpush1.xpose.msra.mxu0 %v283
    %473 = vmatprep.subr.mxu0 0.0
    %474 = vmatpush1.xpose.msra.mxu0 %v286
    %475 = vmatprep.subr.mxu0 0.0
    %476 = vmatpush1.xpose.msra.mxu0 %v289
    %477 = vmatprep.subr.mxu0 0.0
    %478 = vmatpush1.xpose.msra.mxu0 %v292
    %479 = vmatprep.subr.mxu0 0.0
    %480 = vmatpush1.xpose.msra.mxu0 %v295
    %481 = vmatprep.subr.mxu0 0.0
    %482 = vmatpush1.xpose.msra.mxu0 %v298
    %483 = vmatprep.subr.mxu0 0.0
    %484 = vmatpush1.xpose.msra.mxu0 %v301
    %485 = vmatprep.subr.mxu0 0.0
    %486 = vmatpush1.xpose.msra.mxu0 %v304
    %487 = vmatprep.subr.mxu0 0.0
    %488 = vmatpush1.xpose.msra.mxu0 %v307
    %489 = vmatprep.subr.mxu0 0.0
    %490 = vmatpush1.xpose.msra.mxu0 0.0
    %491 = vmatprep.subr.mxu0 0.0
    %492 = vmatpush1.xpose.msra.mxu0 0.0
    %493 = vmatprep.subr.mxu0 0.0
    %494 = vmatpush1.xpose.msra.mxu0 0.0
    %495 = vmatprep.subr.mxu0 0.0
    %496 = vmatpush1.xpose.msra.mxu0 0.0
    %497 = vmatprep.subr.mxu0 0.0
    %498 = vmatpush1.xpose.msra.mxu0 0.0
    %499 = vmatprep.subr.mxu0 0.0
    %500 = vmatpush1.xpose.msra.mxu0 0.0
    %501 = vmatprep.subr.mxu0 0.0
    %502 = vmatpush1.xpose.msra.mxu0 0.0
    %503 = vmatprep.subr.mxu0 0.0
    %504 = vmatpush1.xpose.msra.mxu0 0.0
    %505 = vmatprep.subr.mxu0 0.0
    %506 = vmatpush1.xpose.msra.mxu0 0.0
    %507 = vmatprep.subr.mxu0 0.0
    %508 = vmatpush1.xpose.msra.mxu0 0.0
    %509 = vmatprep.subr.mxu0 0.0
    %510 = vmatpush1.xpose.msra.mxu0 0.0
    %511 = vmatprep.subr.mxu0 0.0
    %512 = vmatpush1.xpose.msra.mxu0 0.0
    %513 = vmatprep.subr.mxu0 0.0
    %514 = vmatpush1.xpose.msra.mxu0 0.0
    %515 = vmatprep.subr.mxu0 0.0
    %516 = vmatpush1.xpose.msra.mxu0 0.0
    %517 = vmatprep.subr.mxu0 0.0
    %518 = vmatpush1.xpose.msra.mxu0 0.0
    %519 = vmatprep.subr.mxu0 0.0
    %520 = vmatpush1.xpose.msra.mxu0 0.0
    %521 = vmatprep.mubr.f32.mxu0 0.0
    %522 = vmatmul.mubr.f32.gmra.mrb[0].mxu0 %v455
    %v523 = vpop.f32.mrb[0].mxu0
    %v524 = vadd.f32 0.0, %v523
    %v525 = vpop.f32.mrb[0].mxu0
    %526 = vdwg.mxu0
    %528 = vset.pattern.permute.xlu0 0
    %529 = vperm.xlu0 %528, %v376
    %v530 = vpop.permute.xlu0 %529
    %533 = vset.pattern.permute.xlu0 0
    %534 = vperm.xlu0 %533, %v381
    %v535 = vpop.permute.xlu0 %534
    %538 = vset.pattern.permute.xlu0 0
    %539 = vperm.xlu0 %538, %v386
    %v540 = vpop.permute.xlu0 %539
    %543 = vset.pattern.permute.xlu0 0
    %544 = vperm.xlu0 %543, %v391
    %v545 = vpop.permute.xlu0 %544
    %548 = vset.pattern.permute.xlu0 0
    %549 = vperm.xlu0 %548, %v396
    %v550 = vpop.permute.xlu0 %549
    %553 = vset.pattern.permute.xlu0 0
    %554 = vperm.xlu0 %553, %v401
    %v555 = vpop.permute.xlu0 %554
    %558 = vset.pattern.permute.xlu0 0
    %559 = vperm.xlu0 %558, %v406
    %v560 = vpop.permute.xlu0 %559
    %563 = vset.pattern.permute.xlu0 0
    %564 = vperm.xlu0 %563, %v411
    %v565 = vpop.permute.xlu0 %564
    %568 = vset.pattern.permute.xlu0 0
    %569 = vperm.xlu0 %568, %v416
    %v570 = vpop.permute.xlu0 %569
    %573 = vset.pattern.permute.xlu0 0
    %574 = vperm.xlu0 %573, %v421
    %v575 = vpop.permute.xlu0 %574
    %578 = vset.pattern.permute.xlu0 0
    %579 = vperm.xlu0 %578, %v426
    %v580 = vpop.permute.xlu0 %579
    %583 = vset.pattern.permute.xlu0 0
    %584 = vperm.xlu0 %583, %v431
    %v585 = vpop.permute.xlu0 %584
    %588 = vset.pattern.permute.xlu0 0
    %589 = vperm.xlu0 %588, %v436
    %v590 = vpop.permute.xlu0 %589
    %593 = vset.pattern.permute.xlu0 0
    %594 = vperm.xlu0 %593, %v441
    %v595 = vpop.permute.xlu0 %594
    %598 = vset.pattern.permute.xlu0 0
    %599 = vperm.xlu0 %598, %v446
    %v600 = vpop.permute.xlu0 %599
    %603 = vset.pattern.permute.xlu0 0
    %604 = vperm.xlu0 %603, %v451
    %v605 = vpop.permute.xlu0 %604
    %v607 = vlaneseq
    %v608 = vshrl.u32 %v607, 7
    %v609 = vsub.s32 0, %v608
    %v610 = vrot.slane %v524, %v609
    %v611 = vadd.f32 %v530, %v610
    %v612 = vadd.f32 %v535, %v610
    %v613 = vadd.f32 %v540, %v610
    %v614 = vadd.f32 %v545, %v610
    %v615 = vadd.f32 %v550, %v610
    %v616 = vadd.f32 %v555, %v610
    %v617 = vadd.f32 %v560, %v610
    %v618 = vadd.f32 %v565, %v610
    %v619 = vadd.f32 %v570, %v610
    %v620 = vadd.f32 %v575, %v610
    %v621 = vadd.f32 %v580, %v610
    %v622 = vadd.f32 %v585, %v610
    %v623 = vadd.f32 %v590, %v610
    %v624 = vadd.f32 %v595, %v610
    %v625 = vadd.f32 %v600, %v610
    %v626 = vadd.f32 %v605, %v610
    %vm627 = vcmp.gt.f32.partialorder %v611, 0.0
    %vm628 = vcmp.gt.f32.partialorder %v612, 0.0
    %vm629 = vcmp.gt.f32.partialorder %v613, 0.0
    %vm630 = vcmp.gt.f32.partialorder %v614, 0.0
    %vm631 = vcmp.gt.f32.partialorder %v615, 0.0
    %vm632 = vcmp.gt.f32.partialorder %v616, 0.0
    %vm633 = vcmp.gt.f32.partialorder %v617, 0.0
    %vm634 = vcmp.gt.f32.partialorder %v618, 0.0
    %vm635 = vcmp.gt.f32.partialorder %v619, 0.0
    %vm636 = vcmp.gt.f32.partialorder %v620, 0.0
    %vm637 = vcmp.gt.f32.partialorder %v621, 0.0
    %vm638 = vcmp.gt.f32.partialorder %v622, 0.0
    %vm639 = vcmp.gt.f32.partialorder %v623, 0.0
    %vm640 = vcmp.gt.f32.partialorder %v624, 0.0
    %vm641 = vcmp.gt.f32.partialorder %v625, 0.0
    %vm642 = vcmp.gt.f32.partialorder %v626, 0.0
    %v643 = vmul.f32 %v611, 0.2
    %v644 = vmul.f32 %v612, 0.2
    %v645 = vmul.f32 %v613, 0.2
    %v646 = vmul.f32 %v614, 0.2
    %v647 = vmul.f32 %v615, 0.2
    %v648 = vmul.f32 %v616, 0.2
    %v649 = vmul.f32 %v617, 0.2
    %v650 = vmul.f32 %v618, 0.2
    %v651 = vmul.f32 %v619, 0.2
    %v652 = vmul.f32 %v620, 0.2
    %v653 = vmul.f32 %v621, 0.2
    %v654 = vmul.f32 %v622, 0.2
    %v655 = vmul.f32 %v623, 0.2
    %v656 = vmul.f32 %v624, 0.2
    %v657 = vmul.f32 %v625, 0.2
    %v658 = vmul.f32 %v626, 0.2
    %v659 = vsel %vm627, %v611, %v643
    %v660 = vsel %vm628, %v612, %v644
    %v661 = vsel %vm629, %v613, %v645
    %v662 = vsel %vm630, %v614, %v646
    %v663 = vsel %vm631, %v615, %v647
    %v664 = vsel %vm632, %v616, %v648
    %v665 = vsel %vm633, %v617, %v649
    %v666 = vsel %vm634, %v618, %v650
    %v667 = vsel %vm635, %v619, %v651
    %v668 = vsel %vm636, %v620, %v652
    %v669 = vsel %vm637, %v621, %v653
    %v670 = vsel %vm638, %v622, %v654
    %v671 = vsel %vm639, %v623, %v655
    %v672 = vsel %vm640, %v624, %v656
    %v673 = vsel %vm641, %v625, %v657
    %v674 = vsel %vm642, %v626, %v658
    %vm675 = vcmp.gt.f32.partialorder %v36, 0.0
    %vm676 = vcmp.gt.f32.partialorder %v37, 0.0
    %vm677 = vcmp.gt.f32.partialorder %v38, 0.0
    %vm678 = vcmp.gt.f32.partialorder %v39, 0.0
    %vm679 = vcmp.gt.f32.partialorder %v40, 0.0
    %vm680 = vcmp.gt.f32.partialorder %v41, 0.0
    %vm681 = vcmp.gt.f32.partialorder %v42, 0.0
    %vm682 = vcmp.gt.f32.partialorder %v43, 0.0
    %vm683 = vcmp.gt.f32.partialorder %v44, 0.0
    %vm684 = vcmp.gt.f32.partialorder %v45, 0.0
    %vm685 = vcmp.gt.f32.partialorder %v46, 0.0
    %vm686 = vcmp.gt.f32.partialorder %v47, 0.0
    %vm687 = vcmp.gt.f32.partialorder %v48, 0.0
    %vm688 = vcmp.gt.f32.partialorder %v49, 0.0
    %vm689 = vcmp.gt.f32.partialorder %v50, 0.0
    %vm690 = vcmp.gt.f32.partialorder %v51, 0.0
    %v691 = vsel %vm675, %v659, -9e+15
    %v692 = vsel %vm676, %v660, -9e+15
    %v693 = vsel %vm677, %v661, -9e+15
    %v694 = vsel %vm678, %v662, -9e+15
    %v695 = vsel %vm679, %v663, -9e+15
    %v696 = vsel %vm680, %v664, -9e+15
    %v697 = vsel %vm681, %v665, -9e+15
    %v698 = vsel %vm682, %v666, -9e+15
    %v699 = vsel %vm683, %v667, -9e+15
    %v700 = vsel %vm684, %v668, -9e+15
    %v701 = vsel %vm685, %v669, -9e+15
    %v702 = vsel %vm686, %v670, -9e+15
    %v703 = vsel %vm687, %v671, -9e+15
    %v704 = vsel %vm688, %v672, -9e+15
    %v705 = vsel %vm689, %v673, -9e+15
    %v706 = vsel %vm690, %v674, -9e+15
    %707 = vmax.xlane.f32.xlu0 %v691
    %v708 = vpop.xlane.xlu0 %707
    %709 = vmax.xlane.f32.xlu0 %v692
    %v710 = vpop.xlane.xlu0 %709
    %711 = vmax.xlane.f32.xlu0 %v693
    %v712 = vpop.xlane.xlu0 %711
    %713 = vmax.xlane.f32.xlu0 %v694
    %v714 = vpop.xlane.xlu0 %713
    %715 = vmax.xlane.f32.xlu0 %v695
    %v716 = vpop.xlane.xlu0 %715
    %717 = vmax.xlane.f32.xlu0 %v696
    %v718 = vpop.xlane.xlu0 %717
    %719 = vmax.xlane.f32.xlu0 %v697
    %v720 = vpop.xlane.xlu0 %719
    %721 = vmax.xlane.f32.xlu0 %v698
    %v722 = vpop.xlane.xlu0 %721
    %723 = vmax.xlane.f32.xlu0 %v699
    %v724 = vpop.xlane.xlu0 %723
    %725 = vmax.xlane.f32.xlu0 %v700
    %v726 = vpop.xlane.xlu0 %725
    %727 = vmax.xlane.f32.xlu0 %v701
    %v728 = vpop.xlane.xlu0 %727
    %729 = vmax.xlane.f32.xlu0 %v702
    %v730 = vpop.xlane.xlu0 %729
    %731 = vmax.xlane.f32.xlu0 %v703
    %v732 = vpop.xlane.xlu0 %731
    %733 = vmax.xlane.f32.xlu0 %v704
    %v734 = vpop.xlane.xlu0 %733
    %735 = vmax.xlane.f32.xlu0 %v705
    %v736 = vpop.xlane.xlu0 %735
    %737 = vmax.xlane.f32.xlu0 %v706
    %v738 = vpop.xlane.xlu0 %737
    %v739 = vsub.f32 %v691, %v708
    %v740 = vsub.f32 %v692, %v710
    %v741 = vsub.f32 %v693, %v712
    %v742 = vsub.f32 %v694, %v714
    %v743 = vsub.f32 %v695, %v716
    %v744 = vsub.f32 %v696, %v718
    %v745 = vsub.f32 %v697, %v720
    %v746 = vsub.f32 %v698, %v722
    %v747 = vsub.f32 %v699, %v724
    %v748 = vsub.f32 %v700, %v726
    %v749 = vsub.f32 %v701, %v728
    %v750 = vsub.f32 %v702, %v730
    %v751 = vsub.f32 %v703, %v732
    %v752 = vsub.f32 %v704, %v734
    %v753 = vsub.f32 %v705, %v736
    %v754 = vsub.f32 %v706, %v738
    %v755 = vmul.f32 %v739, 1.442695
    %v756 = vpow.pop %v755
    %v757 = vmul.f32 %v740, 1.442695
    %v758 = vpow.pop %v757
    %v759 = vmul.f32 %v741, 1.442695
    %v760 = vpow.pop %v759
    %v761 = vmul.f32 %v742, 1.442695
    %v762 = vpow.pop %v761
    %v763 = vmul.f32 %v743, 1.442695
    %v764 = vpow.pop %v763
    %v765 = vmul.f32 %v744, 1.442695
    %v766 = vpow.pop %v765
    %v767 = vmul.f32 %v745, 1.442695
    %v768 = vpow.pop %v767
    %v769 = vmul.f32 %v746, 1.442695
    %v770 = vpow.pop %v769
    %v771 = vmul.f32 %v747, 1.442695
    %v772 = vpow.pop %v771
    %v773 = vmul.f32 %v748, 1.442695
    %v774 = vpow.pop %v773
    %v775 = vmul.f32 %v749, 1.442695
    %v776 = vpow.pop %v775
    %v777 = vmul.f32 %v750, 1.442695
    %v778 = vpow.pop %v777
    %v779 = vmul.f32 %v751, 1.442695
    %v780 = vpow.pop %v779
    %v781 = vmul.f32 %v752, 1.442695
    %v782 = vpow.pop %v781
    %v783 = vmul.f32 %v753, 1.442695
    %v784 = vpow.pop %v783
    %v785 = vmul.f32 %v754, 1.442695
    %v786 = vpow.pop %v785
    %787 = vadd.xlane.f32.xlu0 %v756
    %v788 = vpop.xlane.xlu0 %787
    %789 = vadd.xlane.f32.xlu0 %v758
    %v790 = vpop.xlane.xlu0 %789
    %791 = vadd.xlane.f32.xlu0 %v760
    %v792 = vpop.xlane.xlu0 %791
    %793 = vadd.xlane.f32.xlu0 %v762
    %v794 = vpop.xlane.xlu0 %793
    %795 = vadd.xlane.f32.xlu0 %v764
    %v796 = vpop.xlane.xlu0 %795
    %797 = vadd.xlane.f32.xlu0 %v766
    %v798 = vpop.xlane.xlu0 %797
    %799 = vadd.xlane.f32.xlu0 %v768
    %v800 = vpop.xlane.xlu0 %799
    %801 = vadd.xlane.f32.xlu0 %v770
    %v802 = vpop.xlane.xlu0 %801
    %803 = vadd.xlane.f32.xlu0 %v772
    %v804 = vpop.xlane.xlu0 %803
    %805 = vadd.xlane.f32.xlu0 %v774
    %v806 = vpop.xlane.xlu0 %805
    %807 = vadd.xlane.f32.xlu0 %v776
    %v808 = vpop.xlane.xlu0 %807
    %809 = vadd.xlane.f32.xlu0 %v778
    %v810 = vpop.xlane.xlu0 %809
    %811 = vadd.xlane.f32.xlu0 %v780
    %v812 = vpop.xlane.xlu0 %811
    %813 = vadd.xlane.f32.xlu0 %v782
    %v814 = vpop.xlane.xlu0 %813
    %815 = vadd.xlane.f32.xlu0 %v784
    %v816 = vpop.xlane.xlu0 %815
    %817 = vadd.xlane.f32.xlu0 %v786
    %v818 = vpop.xlane.xlu0 %817
    %v819 = vrcp.pop %v788
    %v820 = vrcp.pop %v790
    %v821 = vrcp.pop %v792
    %v822 = vrcp.pop %v794
    %v823 = vrcp.pop %v796
    %v824 = vrcp.pop %v798
    %v825 = vrcp.pop %v800
    %v826 = vrcp.pop %v802
    %v827 = vrcp.pop %v804
    %v828 = vrcp.pop %v806
    %v829 = vrcp.pop %v808
    %v830 = vrcp.pop %v810
    %v831 = vrcp.pop %v812
    %v832 = vrcp.pop %v814
    %v833 = vrcp.pop %v816
    %v834 = vrcp.pop %v818
    %v835 = vmul.f32 %v756, %v819
    %v836 = vmul.f32 %v758, %v820
    %v837 = vmul.f32 %v760, %v821
    %v838 = vmul.f32 %v762, %v822
    %v839 = vmul.f32 %v764, %v823
    %v840 = vmul.f32 %v766, %v824
    %v841 = vmul.f32 %v768, %v825
    %v842 = vmul.f32 %v770, %v826
    %v843 = vmul.f32 %v772, %v827
    %v844 = vmul.f32 %v774, %v828
    %v845 = vmul.f32 %v776, %v829
    %v846 = vmul.f32 %v778, %v830
    %v847 = vmul.f32 %v780, %v831
    %v848 = vmul.f32 %v782, %v832
    %v849 = vmul.f32 %v784, %v833
    %v850 = vmul.f32 %v786, %v834
    %851 = vmatprep.subr.mxu0 0.0
    %852 = vmatpush1.msra.mxu0 %v183
    %853 = vmatprep.subr.mxu0 0.0
    %854 = vmatpush1.msra.mxu0 %v188
    %855 = vmatprep.subr.mxu0 0.0
    %856 = vmatpush1.msra.mxu0 %v193
    %857 = vmatprep.subr.mxu0 0.0
    %858 = vmatpush1.msra.mxu0 %v198
    %859 = vmatprep.subr.mxu0 0.0
    %860 = vmatpush1.msra.mxu0 %v203
    %861 = vmatprep.subr.mxu0 0.0
    %862 = vmatpush1.msra.mxu0 %v208
    %863 = vmatprep.subr.mxu0 0.0
    %864 = vmatpush1.msra.mxu0 %v213
    %865 = vmatprep.subr.mxu0 0.0
    %866 = vmatpush1.msra.mxu0 %v218
    %867 = vmatprep.subr.mxu0 0.0
    %868 = vmatpush1.msra.mxu0 %v223
    %869 = vmatprep.subr.mxu0 0.0
    %870 = vmatpush1.msra.mxu0 %v228
    %871 = vmatprep.subr.mxu0 0.0
    %872 = vmatpush1.msra.mxu0 %v233
    %873 = vmatprep.subr.mxu0 0.0
    %874 = vmatpush1.msra.mxu0 %v238
    %875 = vmatprep.subr.mxu0 0.0
    %876 = vmatpush1.msra.mxu0 %v243
    %877 = vmatprep.subr.mxu0 0.0
    %878 = vmatpush1.msra.mxu0 %v248
    %879 = vmatprep.subr.mxu0 0.0
    %880 = vmatpush1.msra.mxu0 %v253
    %881 = vmatprep.subr.mxu0 0.0
    %882 = vmatpush1.msra.mxu0 %v258
    %883 = vmatprep.subr.mxu0 0.0
    %884 = vmatpush1.msra.mxu0 0.0
    %885 = vmatprep.subr.mxu0 0.0
    %886 = vmatpush1.msra.mxu0 0.0
    %887 = vmatprep.subr.mxu0 0.0
    %888 = vmatpush1.msra.mxu0 0.0
    %889 = vmatprep.subr.mxu0 0.0
    %890 = vmatpush1.msra.mxu0 0.0
    %891 = vmatprep.subr.mxu0 0.0
    %892 = vmatpush1.msra.mxu0 0.0
    %893 = vmatprep.subr.mxu0 0.0
    %894 = vmatpush1.msra.mxu0 0.0
    %895 = vmatprep.subr.mxu0 0.0
    %896 = vmatpush1.msra.mxu0 0.0
    %897 = vmatprep.subr.mxu0 0.0
    %898 = vmatpush1.msra.mxu0 0.0
    %899 = vmatprep.subr.mxu0 0.0
    %900 = vmatpush1.msra.mxu0 0.0
    %901 = vmatprep.subr.mxu0 0.0
    %902 = vmatpush1.msra.mxu0 0.0
    %903 = vmatprep.subr.mxu0 0.0
    %904 = vmatpush1.msra.mxu0 0.0
    %905 = vmatprep.subr.mxu0 0.0
    %906 = vmatpush1.msra.mxu0 0.0
    %907 = vmatprep.subr.mxu0 0.0
    %908 = vmatpush1.msra.mxu0 0.0
    %909 = vmatprep.subr.mxu0 0.0
    %910 = vmatpush1.msra.mxu0 0.0
    %911 = vmatprep.subr.mxu0 0.0
    %912 = vmatpush1.msra.mxu0 0.0
    %913 = vmatprep.subr.mxu0 0.0
    %914 = vmatpush1.msra.mxu0 0.0
    %915 = vmatprep.mubr.f32.mxu0 0.0
    %916 = vmatmul.mubr.f32.gmra.mrb[0].mxu0 %v835
    %v917 = vpop.f32.mrb[0].mxu0
    %v918 = vadd.f32 0.0, %v917
    %v919 = vpop.f32.mrb[0].mxu0
    %920 = vmatprep.mubr.f32.mxu0 0.0
    %921 = vmatmul.mubr.f32.gmra.mrb[0].mxu0 %v836
    %v922 = vpop.f32.mrb[0].mxu0
    %v923 = vadd.f32 0.0, %v922
    %v924 = vpop.f32.mrb[0].mxu0
    %925 = vmatprep.mubr.f32.mxu0 0.0
    %926 = vmatmul.mubr.f32.gmra.mrb[0].mxu0 %v837
    %v927 = vpop.f32.mrb[0].mxu0
    %v928 = vadd.f32 0.0, %v927
    %v929 = vpop.f32.mrb[0].mxu0
    %930 = vmatprep.mubr.f32.mxu0 0.0
    %931 = vmatmul.mubr.f32.gmra.mrb[0].mxu0 %v838
    %v932 = vpop.f32.mrb[0].mxu0
    %v933 = vadd.f32 0.0, %v932
    %v934 = vpop.f32.mrb[0].mxu0
    %935 = vmatprep.mubr.f32.mxu0 0.0
    %936 = vmatmul.mubr.f32.gmra.mrb[0].mxu0 %v839
    %v937 = vpop.f32.mrb[0].mxu0
    %v938 = vadd.f32 0.0, %v937
    %v939 = vpop.f32.mrb[0].mxu0
    %940 = vmatprep.mubr.f32.mxu0 0.0
    %941 = vmatmul.mubr.f32.gmra.mrb[0].mxu0 %v840
    %v942 = vpop.f32.mrb[0].mxu0
    %v943 = vadd.f32 0.0, %v942
    %v944 = vpop.f32.mrb[0].mxu0
    %945 = vmatprep.mubr.f32.mxu0 0.0
    %946 = vmatmul.mubr.f32.gmra.mrb[0].mxu0 %v841
    %v947 = vpop.f32.mrb[0].mxu0
    %v948 = vadd.f32 0.0, %v947
    %v949 = vpop.f32.mrb[0].mxu0
    %950 = vmatprep.mubr.f32.mxu0 0.0
    %951 = vmatmul.mubr.f32.gmra.mrb[0].mxu0 %v842
    %v952 = vpop.f32.mrb[0].mxu0
    %v953 = vadd.f32 0.0, %v952
    %v954 = vpop.f32.mrb[0].mxu0
    %955 = vmatprep.mubr.f32.mxu0 0.0
    %956 = vmatmul.mubr.f32.gmra.mrb[0].mxu0 %v843
    %v957 = vpop.f32.mrb[0].mxu0
    %v958 = vadd.f32 0.0, %v957
    %v959 = vpop.f32.mrb[0].mxu0
    %960 = vmatprep.mubr.f32.mxu0 0.0
    %961 = vmatmul.mubr.f32.gmra.mrb[0].mxu0 %v844
    %v962 = vpop.f32.mrb[0].mxu0
    %v963 = vadd.f32 0.0, %v962
    %v964 = vpop.f32.mrb[0].mxu0
    %965 = vmatprep.mubr.f32.mxu0 0.0
    %966 = vmatmul.mubr.f32.gmra.mrb[0].mxu0 %v845
    %v967 = vpop.f32.mrb[0].mxu0
    %v968 = vadd.f32 0.0, %v967
    %v969 = vpop.f32.mrb[0].mxu0
    %970 = vmatprep.mubr.f32.mxu0 0.0
    %971 = vmatmul.mubr.f32.gmra.mrb[0].mxu0 %v846
    %v972 = vpop.f32.mrb[0].mxu0
    %v973 = vadd.f32 0.0, %v972
    %v974 = vpop.f32.mrb[0].mxu0
    %975 = vmatprep.mubr.f32.mxu0 0.0
    %976 = vmatmul.mubr.f32.gmra.mrb[0].mxu0 %v847
    %v977 = vpop.f32.mrb[0].mxu0
    %v978 = vadd.f32 0.0, %v977
    %v979 = vpop.f32.mrb[0].mxu0
    %980 = vmatprep.mubr.f32.mxu0 0.0
    %981 = vmatmul.mubr.f32.gmra.mrb[0].mxu0 %v848
    %v982 = vpop.f32.mrb[0].mxu0
    %v983 = vadd.f32 0.0, %v982
    %v984 = vpop.f32.mrb[0].mxu0
    %985 = vmatprep.mubr.f32.mxu0 0.0
    %986 = vmatmul.mubr.f32.gmra.mrb[0].mxu0 %v849
    %v987 = vpop.f32.mrb[0].mxu0
    %v988 = vadd.f32 0.0, %v987
    %v989 = vpop.f32.mrb[0].mxu0
    %990 = vmatprep.mubr.f32.mxu0 0.0
    %991 = vmatmul.mubr.f32.gmra.mrb[0].mxu0 %v850
    %v992 = vpop.f32.mrb[0].mxu0
    %v993 = vadd.f32 0.0, %v992
    %v994 = vpop.f32.mrb[0].mxu0
    %995 = vdwg.mxu0
    %vm996 = vcmp.gt.f32.partialorder %v918, 0.0
    %vm997 = vcmp.gt.f32.partialorder %v923, 0.0
    %vm998 = vcmp.gt.f32.partialorder %v928, 0.0
    %vm999 = vcmp.gt.f32.partialorder %v933, 0.0
    %vm1000 = vcmp.gt.f32.partialorder %v938, 0.0
    %vm1001 = vcmp.gt.f32.partialorder %v943, 0.0
    %vm1002 = vcmp.gt.f32.partialorder %v948, 0.0
    %vm1003 = vcmp.gt.f32.partialorder %v953, 0.0
    %vm1004 = vcmp.gt.f32.partialorder %v958, 0.0
    %vm1005 = vcmp.gt.f32.partialorder %v963, 0.0
    %vm1006 = vcmp.gt.f32.partialorder %v968, 0.0
    %vm1007 = vcmp.gt.f32.partialorder %v973, 0.0
    %vm1008 = vcmp.gt.f32.partialorder %v978, 0.0
    %vm1009 = vcmp.gt.f32.partialorder %v983, 0.0
    %vm1010 = vcmp.gt.f32.partialorder %v988, 0.0
    %vm1011 = vcmp.gt.f32.partialorder %v993, 0.0
    %v1012 = vmin.f32 %v918, 0.0
    %v1013 = vmin.f32 %v923, 0.0
    %v1014 = vmin.f32 %v928, 0.0
    %v1015 = vmin.f32 %v933, 0.0
    %v1016 = vmin.f32 %v938, 0.0
    %v1017 = vmin.f32 %v943, 0.0
    %v1018 = vmin.f32 %v948, 0.0
    %v1019 = vmin.f32 %v953, 0.0
    %v1020 = vmin.f32 %v958, 0.0
    %v1021 = vmin.f32 %v963, 0.0
    %v1022 = vmin.f32 %v968, 0.0
    %v1023 = vmin.f32 %v973, 0.0
    %v1024 = vmin.f32 %v978, 0.0
    %v1025 = vmin.f32 %v983, 0.0
    %v1026 = vmin.f32 %v988, 0.0
    %v1027 = vmin.f32 %v993, 0.0
    %v1028 = vmul.f32 %v1012, 1.442695
    %v1029 = vpow.pop %v1028
    %v1030 = vmul.f32 %v1013, 1.442695
    %v1031 = vpow.pop %v1030
    %v1032 = vmul.f32 %v1014, 1.442695
    %v1033 = vpow.pop %v1032
    %v1034 = vmul.f32 %v1015, 1.442695
    %v1035 = vpow.pop %v1034
    %v1036 = vmul.f32 %v1016, 1.442695
    %v1037 = vpow.pop %v1036
    %v1038 = vmul.f32 %v1017, 1.442695
    %v1039 = vpow.pop %v1038
    %v1040 = vmul.f32 %v1018, 1.442695
    %v1041 = vpow.pop %v1040
    %v1042 = vmul.f32 %v1019, 1.442695
    %v1043 = vpow.pop %v1042
    %v1044 = vmul.f32 %v1020, 1.442695
    %v1045 = vpow.pop %v1044
    %v1046 = vmul.f32 %v1021, 1.442695
    %v1047 = vpow.pop %v1046
    %v1048 = vmul.f32 %v1022, 1.442695
    %v1049 = vpow.pop %v1048
    %v1050 = vmul.f32 %v1023, 1.442695
    %v1051 = vpow.pop %v1050
    %v1052 = vmul.f32 %v1024, 1.442695
    %v1053 = vpow.pop %v1052
    %v1054 = vmul.f32 %v1025, 1.442695
    %v1055 = vpow.pop %v1054
    %v1056 = vmul.f32 %v1026, 1.442695
    %v1057 = vpow.pop %v1056
    %v1058 = vmul.f32 %v1027, 1.442695
    %v1059 = vpow.pop %v1058
    %v1060 = vsub.f32 %v1029, 1.0
    %v1061 = vsub.f32 %v1031, 1.0
    %v1062 = vsub.f32 %v1033, 1.0
    %v1063 = vsub.f32 %v1035, 1.0
    %v1064 = vsub.f32 %v1037, 1.0
    %v1065 = vsub.f32 %v1039, 1.0
    %v1066 = vsub.f32 %v1041, 1.0
    %v1067 = vsub.f32 %v1043, 1.0
    %v1068 = vsub.f32 %v1045, 1.0
    %v1069 = vsub.f32 %v1047, 1.0
    %v1070 = vsub.f32 %v1049, 1.0
    %v1071 = vsub.f32 %v1051, 1.0
    %v1072 = vsub.f32 %v1053, 1.0
    %v1073 = vsub.f32 %v1055, 1.0
    %v1074 = vsub.f32 %v1057, 1.0
    %v1075 = vsub.f32 %v1059, 1.0
    %v1076 = vsel %vm996, %v918, %v1060
    %v1077 = vsel %vm997, %v923, %v1061
    %v1078 = vsel %vm998, %v928, %v1062
    %v1079 = vsel %vm999, %v933, %v1063
    %v1080 = vsel %vm1000, %v938, %v1064
    %v1081 = vsel %vm1001, %v943, %v1065
    %v1082 = vsel %vm1002, %v948, %v1066
    %v1083 = vsel %vm1003, %v953, %v1067
    %v1084 = vsel %vm1004, %v958, %v1068
    %v1085 = vsel %vm1005, %v963, %v1069
    %v1086 = vsel %vm1006, %v968, %v1070
    %v1087 = vsel %vm1007, %v973, %v1071
    %v1088 = vsel %vm1008, %v978, %v1072
    %v1089 = vsel %vm1009, %v983, %v1073
    %v1090 = vsel %vm1010, %v988, %v1074
    %v1091 = vsel %vm1011, %v993, %v1075
    %v1093 = vsel %vm67, %v1076, 0
    %v1096 = vsel %vm67, %v1077, 0
    %v1099 = vsel %vm67, %v1078, 0
    %v1102 = vsel %vm67, %v1079, 0
    %v1105 = vsel %vm67, %v1080, 0
    %v1108 = vsel %vm67, %v1081, 0
    %v1111 = vsel %vm67, %v1082, 0
    %v1114 = vsel %vm67, %v1083, 0
    %v1117 = vsel %vm67, %v1084, 0
    %v1120 = vsel %vm67, %v1085, 0
    %v1123 = vsel %vm67, %v1086, 0
    %v1126 = vsel %vm67, %v1087, 0
    %v1129 = vsel %vm67, %v1088, 0
    %v1132 = vsel %vm67, %v1089, 0
    %v1135 = vsel %vm67, %v1090, 0
    %v1138 = vsel %vm67, %v1091, 0
    %1140 = vmatprep.subr.mxu0 0.0
    %1141 = vmatpush1.msra.mxu0 %v61
    %1142 = vmatprep.subr.mxu0 0.0
    %1143 = vmatpush1.msra.mxu0 %v62
    %1144 = vmatprep.subr.mxu0 0.0
    %1145 = vmatpush1.msra.mxu0 %v63
    %1146 = vmatprep.subr.mxu0 0.0
    %1147 = vmatpush1.msra.mxu0 %v64
    %1148 = vmatprep.subr.mxu0 0.0
    %1149 = vmatpush1.msra.mxu0 0.0
    %1150 = vmatprep.subr.mxu0 0.0
    %1151 = vmatpush1.msra.mxu0 0.0
    %1152 = vmatprep.subr.mxu0 0.0
    %1153 = vmatpush1.msra.mxu0 0.0
    %1154 = vmatprep.subr.mxu0 0.0
    %1155 = vmatpush1.msra.mxu0 0.0
    %1156 = vmatprep.subr.mxu0 0.0
    %1157 = vmatpush1.msra.mxu0 0.0
    %1158 = vmatprep.subr.mxu0 0.0
    %1159 = vmatpush1.msra.mxu0 0.0
    %1160 = vmatprep.subr.mxu0 0.0
    %1161 = vmatpush1.msra.mxu0 0.0
    %1162 = vmatprep.subr.mxu0 0.0
    %1163 = vmatpush1.msra.mxu0 0.0
    %1164 = vmatprep.subr.mxu0 0.0
    %1165 = vmatpush1.msra.mxu0 0.0
    %1166 = vmatprep.subr.mxu0 0.0
    %1167 = vmatpush1.msra.mxu0 0.0
    %1168 = vmatprep.subr.mxu0 0.0
    %1169 = vmatpush1.msra.mxu0 0.0
    %1170 = vmatprep.subr.mxu0 0.0
    %1171 = vmatpush1.msra.mxu0 0.0
    %1172 = vmatprep.subr.mxu0 0.0
    %1173 = vmatpush1.msra.mxu0 0.0
    %1174 = vmatprep.subr.mxu0 0.0
    %1175 = vmatpush1.msra.mxu0 0.0
    %1176 = vmatprep.subr.mxu0 0.0
    %1177 = vmatpush1.msra.mxu0 0.0
    %1178 = vmatprep.subr.mxu0 0.0
    %1179 = vmatpush1.msra.mxu0 0.0
    %1180 = vmatprep.subr.mxu0 0.0
    %1181 = vmatpush1.msra.mxu0 0.0
    %1182 = vmatprep.subr.mxu0 0.0
    %1183 = vmatpush1.msra.mxu0 0.0
    %1184 = vmatprep.subr.mxu0 0.0
    %1185 = vmatpush1.msra.mxu0 0.0
    %1186 = vmatprep.subr.mxu0 0.0
    %1187 = vmatpush1.msra.mxu0 0.0
    %1188 = vmatprep.subr.mxu0 0.0
    %1189 = vmatpush1.msra.mxu0 0.0
    %1190 = vmatprep.subr.mxu0 0.0
    %1191 = vmatpush1.msra.mxu0 0.0
    %1192 = vmatprep.subr.mxu0 0.0
    %1193 = vmatpush1.msra.mxu0 0.0
    %1194 = vmatprep.subr.mxu0 0.0
    %1195 = vmatpush1.msra.mxu0 0.0
    %1196 = vmatprep.subr.mxu0 0.0
    %1197 = vmatpush1.msra.mxu0 0.0
    %1198 = vmatprep.subr.mxu0 0.0
    %1199 = vmatpush1.msra.mxu0 0.0
    %1200 = vmatprep.subr.mxu0 0.0
    %1201 = vmatpush1.msra.mxu0 0.0
    %1202 = vmatprep.subr.mxu0 0.0
    %1203 = vmatpush1.msra.mxu0 0.0
    %1204 = vmatprep.mubr.f32.mxu0 0.0
    %1205 = vmatmul.mubr.f32.gmra.mrb[0].mxu0 %v1093
    %v1206 = vpop.f32.mrb[0].mxu0
    %v1207 = vadd.f32 0.0, %v1206
    %v1208 = vpop.f32.mrb[0].mxu0
    %1209 = vmatprep.mubr.f32.mxu0 0.0
    %1210 = vmatmul.mubr.f32.gmra.mrb[0].mxu0 %v1096
    %v1211 = vpop.f32.mrb[0].mxu0
    %v1212 = vadd.f32 0.0, %v1211
    %v1213 = vpop.f32.mrb[0].mxu0
    %1214 = vmatprep.mubr.f32.mxu0 0.0
    %1215 = vmatmul.mubr.f32.gmra.mrb[0].mxu0 %v1099
    %v1216 = vpop.f32.mrb[0].mxu0
    %v1217 = vadd.f32 0.0, %v1216
    %v1218 = vpop.f32.mrb[0].mxu0
    %1219 = vmatprep.mubr.f32.mxu0 0.0
    %1220 = vmatmul.mubr.f32.gmra.mrb[0].mxu0 %v1102
    %v1221 = vpop.f32.mrb[0].mxu0
    %v1222 = vadd.f32 0.0, %v1221
    %v1223 = vpop.f32.mrb[0].mxu0
    %1224 = vmatprep.mubr.f32.mxu0 0.0
    %1225 = vmatmul.mubr.f32.gmra.mrb[0].mxu0 %v1105
    %v1226 = vpop.f32.mrb[0].mxu0
    %v1227 = vadd.f32 0.0, %v1226
    %v1228 = vpop.f32.mrb[0].mxu0
    %1229 = vmatprep.mubr.f32.mxu0 0.0
    %1230 = vmatmul.mubr.f32.gmra.mrb[0].mxu0 %v1108
    %v1231 = vpop.f32.mrb[0].mxu0
    %v1232 = vadd.f32 0.0, %v1231
    %v1233 = vpop.f32.mrb[0].mxu0
    %1234 = vmatprep.mubr.f32.mxu0 0.0
    %1235 = vmatmul.mubr.f32.gmra.mrb[0].mxu0 %v1111
    %v1236 = vpop.f32.mrb[0].mxu0
    %v1237 = vadd.f32 0.0, %v1236
    %v1238 = vpop.f32.mrb[0].mxu0
    %1239 = vmatprep.mubr.f32.mxu0 0.0
    %1240 = vmatmul.mubr.f32.gmra.mrb[0].mxu0 %v1114
    %v1241 = vpop.f32.mrb[0].mxu0
    %v1242 = vadd.f32 0.0, %v1241
    %v1243 = vpop.f32.mrb[0].mxu0
    %1244 = vmatprep.mubr.f32.mxu0 0.0
    %1245 = vmatmul.mubr.f32.gmra.mrb[0].mxu0 %v1117
    %v1246 = vpop.f32.mrb[0].mxu0
    %v1247 = vadd.f32 0.0, %v1246
    %v1248 = vpop.f32.mrb[0].mxu0
    %1249 = vmatprep.mubr.f32.mxu0 0.0
    %1250 = vmatmul.mubr.f32.gmra.mrb[0].mxu0 %v1120
    %v1251 = vpop.f32.mrb[0].mxu0
    %v1252 = vadd.f32 0.0, %v1251
    %v1253 = vpop.f32.mrb[0].mxu0
    %1254 = vmatprep.mubr.f32.mxu0 0.0
    %1255 = vmatmul.mubr.f32.gmra.mrb[0].mxu0 %v1123
    %v1256 = vpop.f32.mrb[0].mxu0
    %v1257 = vadd.f32 0.0, %v1256
    %v1258 = vpop.f32.mrb[0].mxu0
    %1259 = vmatprep.mubr.f32.mxu0 0.0
    %1260 = vmatmul.mubr.f32.gmra.mrb[0].mxu0 %v1126
    %v1261 = vpop.f32.mrb[0].mxu0
    %v1262 = vadd.f32 0.0, %v1261
    %v1263 = vpop.f32.mrb[0].mxu0
    %1264 = vmatprep.mubr.f32.mxu0 0.0
    %1265 = vmatmul.mubr.f32.gmra.mrb[0].mxu0 %v1129
    %v1266 = vpop.f32.mrb[0].mxu0
    %v1267 = vadd.f32 0.0, %v1266
    %v1268 = vpop.f32.mrb[0].mxu0
    %1269 = vmatprep.mubr.f32.mxu0 0.0
    %1270 = vmatmul.mubr.f32.gmra.mrb[0].mxu0 %v1132
    %v1271 = vpop.f32.mrb[0].mxu0
    %v1272 = vadd.f32 0.0, %v1271
    %v1273 = vpop.f32.mrb[0].mxu0
    %1274 = vmatprep.mubr.f32.mxu0 0.0
    %1275 = vmatmul.mubr.f32.gmra.mrb[0].mxu0 %v1135
    %v1276 = vpop.f32.mrb[0].mxu0
    %v1277 = vadd.f32 0.0, %v1276
    %v1278 = vpop.f32.mrb[0].mxu0
    %1279 = vmatprep.mubr.f32.mxu0 0.0
    %1280 = vmatmul.mubr.f32.gmra.mrb[0].mxu0 %v1138
    %v1281 = vpop.f32.mrb[0].mxu0
    %v1282 = vadd.f32 0.0, %v1281
    %v1283 = vpop.f32.mrb[0].mxu0
    %1284 = vdwg.mxu0
    %1285 = vmatprep.subr.mxu0 0.0
    %1286 = vmatpush1.msra.mxu0 %v1207
    %1287 = vmatprep.subr.mxu0 0.0
    %1288 = vmatpush1.msra.mxu0 %v1212
    %1289 = vmatprep.subr.mxu0 0.0
    %1290 = vmatpush1.msra.mxu0 %v1217
    %1291 = vmatprep.subr.mxu0 0.0
    %1292 = vmatpush1.msra.mxu0 %v1222
    %1293 = vmatprep.subr.mxu0 0.0
    %1294 = vmatpush1.msra.mxu0 %v1227
    %1295 = vmatprep.subr.mxu0 0.0
    %1296 = vmatpush1.msra.mxu0 %v1232
    %1297 = vmatprep.subr.mxu0 0.0
    %1298 = vmatpush1.msra.mxu0 %v1237
    %1299 = vmatprep.subr.mxu0 0.0
    %1300 = vmatpush1.msra.mxu0 %v1242
    %1301 = vmatprep.subr.mxu0 0.0
    %1302 = vmatpush1.msra.mxu0 %v1247
    %1303 = vmatprep.subr.mxu0 0.0
    %1304 = vmatpush1.msra.mxu0 %v1252
    %1305 = vmatprep.subr.mxu0 0.0
    %1306 = vmatpush1.msra.mxu0 %v1257
    %1307 = vmatprep.subr.mxu0 0.0
    %1308 = vmatpush1.msra.mxu0 %v1262
    %1309 = vmatprep.subr.mxu0 0.0
    %1310 = vmatpush1.msra.mxu0 %v1267
    %1311 = vmatprep.subr.mxu0 0.0
    %1312 = vmatpush1.msra.mxu0 %v1272
    %1313 = vmatprep.subr.mxu0 0.0
    %1314 = vmatpush1.msra.mxu0 %v1277
    %1315 = vmatprep.subr.mxu0 0.0
    %1316 = vmatpush1.msra.mxu0 %v1282
    %1317 = vmatprep.subr.mxu0 0.0
    %1318 = vmatpush1.msra.mxu0 0.0
    %1319 = vmatprep.subr.mxu0 0.0
    %1320 = vmatpush1.msra.mxu0 0.0
    %1321 = vmatprep.subr.mxu0 0.0
    %1322 = vmatpush1.msra.mxu0 0.0
    %1323 = vmatprep.subr.mxu0 0.0
    %1324 = vmatpush1.msra.mxu0 0.0
    %1325 = vmatprep.subr.mxu0 0.0
    %1326 = vmatpush1.msra.mxu0 0.0
    %1327 = vmatprep.subr.mxu0 0.0
    %1328 = vmatpush1.msra.mxu0 0.0
    %1329 = vmatprep.subr.mxu0 0.0
    %1330 = vmatpush1.msra.mxu0 0.0
    %1331 = vmatprep.subr.mxu0 0.0
    %1332 = vmatpush1.msra.mxu0 0.0
    %1333 = vmatprep.subr.mxu0 0.0
    %1334 = vmatpush1.msra.mxu0 0.0
    %1335 = vmatprep.subr.mxu0 0.0
    %1336 = vmatpush1.msra.mxu0 0.0
    %1337 = vmatprep.subr.mxu0 0.0
    %1338 = vmatpush1.msra.mxu0 0.0
    %1339 = vmatprep.subr.mxu0 0.0
    %1340 = vmatpush1.msra.mxu0 0.0
    %1341 = vmatprep.subr.mxu0 0.0
    %1342 = vmatpush1.msra.mxu0 0.0
    %1343 = vmatprep.subr.mxu0 0.0
    %1344 = vmatpush1.msra.mxu0 0.0
    %1345 = vmatprep.subr.mxu0 0.0
    %1346 = vmatpush1.msra.mxu0 0.0
    %1347 = vmatprep.subr.mxu0 0.0
    %1348 = vmatpush1.msra.mxu0 0.0
    %1349 = vmatprep.mubr.f32.mxu0 0.0
    %1350 = vmatmul.mubr.f32.gmra.mrb[0].mxu0 %v36
    %v1351 = vpop.f32.mrb[0].mxu0
    %v1352 = vadd.f32 0.0, %v1351
    %v1353 = vpop.f32.mrb[0].mxu0
    %1354 = vmatprep.mubr.f32.mxu0 0.0
    %1355 = vmatmul.mubr.f32.gmra.mrb[0].mxu0 %v37
    %v1356 = vpop.f32.mrb[0].mxu0
    %v1357 = vadd.f32 0.0, %v1356
    %v1358 = vpop.f32.mrb[0].mxu0
    %1359 = vmatprep.mubr.f32.mxu0 0.0
    %1360 = vmatmul.mubr.f32.gmra.mrb[0].mxu0 %v38
    %v1361 = vpop.f32.mrb[0].mxu0
    %v1362 = vadd.f32 0.0, %v1361
    %v1363 = vpop.f32.mrb[0].mxu0
    %1364 = vmatprep.mubr.f32.mxu0 0.0
    %1365 = vmatmul.mubr.f32.gmra.mrb[0].mxu0 %v39
    %v1366 = vpop.f32.mrb[0].mxu0
    %v1367 = vadd.f32 0.0, %v1366
    %v1368 = vpop.f32.mrb[0].mxu0
    %1369 = vmatprep.mubr.f32.mxu0 0.0
    %1370 = vmatmul.mubr.f32.gmra.mrb[0].mxu0 %v40
    %v1371 = vpop.f32.mrb[0].mxu0
    %v1372 = vadd.f32 0.0, %v1371
    %v1373 = vpop.f32.mrb[0].mxu0
    %1374 = vmatprep.mubr.f32.mxu0 0.0
    %1375 = vmatmul.mubr.f32.gmra.mrb[0].mxu0 %v41
    %v1376 = vpop.f32.mrb[0].mxu0
    %v1377 = vadd.f32 0.0, %v1376
    %v1378 = vpop.f32.mrb[0].mxu0
    %1379 = vmatprep.mubr.f32.mxu0 0.0
    %1380 = vmatmul.mubr.f32.gmra.mrb[0].mxu0 %v42
    %v1381 = vpop.f32.mrb[0].mxu0
    %v1382 = vadd.f32 0.0, %v1381
    %v1383 = vpop.f32.mrb[0].mxu0
    %1384 = vmatprep.mubr.f32.mxu0 0.0
    %1385 = vmatmul.mubr.f32.gmra.mrb[0].mxu0 %v43
    %v1386 = vpop.f32.mrb[0].mxu0
    %v1387 = vadd.f32 0.0, %v1386
    %v1388 = vpop.f32.mrb[0].mxu0
    %1389 = vmatprep.mubr.f32.mxu0 0.0
    %1390 = vmatmul.mubr.f32.gmra.mrb[0].mxu0 %v44
    %v1391 = vpop.f32.mrb[0].mxu0
    %v1392 = vadd.f32 0.0, %v1391
    %v1393 = vpop.f32.mrb[0].mxu0
    %1394 = vmatprep.mubr.f32.mxu0 0.0
    %1395 = vmatmul.mubr.f32.gmra.mrb[0].mxu0 %v45
    %v1396 = vpop.f32.mrb[0].mxu0
    %v1397 = vadd.f32 0.0, %v1396
    %v1398 = vpop.f32.mrb[0].mxu0
    %1399 = vmatprep.mubr.f32.mxu0 0.0
    %1400 = vmatmul.mubr.f32.gmra.mrb[0].mxu0 %v46
    %v1401 = vpop.f32.mrb[0].mxu0
    %v1402 = vadd.f32 0.0, %v1401
    %v1403 = vpop.f32.mrb[0].mxu0
    %1404 = vmatprep.mubr.f32.mxu0 0.0
    %1405 = vmatmul.mubr.f32.gmra.mrb[0].mxu0 %v47
    %v1406 = vpop.f32.mrb[0].mxu0
    %v1407 = vadd.f32 0.0, %v1406
    %v1408 = vpop.f32.mrb[0].mxu0
    %1409 = vmatprep.mubr.f32.mxu0 0.0
    %1410 = vmatmul.mubr.f32.gmra.mrb[0].mxu0 %v48
    %v1411 = vpop.f32.mrb[0].mxu0
    %v1412 = vadd.f32 0.0, %v1411
    %v1413 = vpop.f32.mrb[0].mxu0
    %1414 = vmatprep.mubr.f32.mxu0 0.0
    %1415 = vmatmul.mubr.f32.gmra.mrb[0].mxu0 %v49
    %v1416 = vpop.f32.mrb[0].mxu0
    %v1417 = vadd.f32 0.0, %v1416
    %v1418 = vpop.f32.mrb[0].mxu0
    %1419 = vmatprep.mubr.f32.mxu0 0.0
    %1420 = vmatmul.mubr.f32.gmra.mrb[0].mxu0 %v50
    %v1421 = vpop.f32.mrb[0].mxu0
    %v1422 = vadd.f32 0.0, %v1421
    %v1423 = vpop.f32.mrb[0].mxu0
    %1424 = vmatprep.mubr.f32.mxu0 0.0
    %1425 = vmatmul.mubr.f32.gmra.mrb[0].mxu0 %v51
    %v1426 = vpop.f32.mrb[0].mxu0
    %v1427 = vadd.f32 0.0, %v1426
    %v1428 = vpop.f32.mrb[0].mxu0
    %1429 = vdwg.mxu0
    %v1430 = vmax.f32 %v1352, 0.0
    %v1431 = vmax.f32 %v1357, 0.0
    %v1432 = vmax.f32 %v1362, 0.0
    %v1433 = vmax.f32 %v1367, 0.0
    %v1434 = vmax.f32 %v1372, 0.0
    %v1435 = vmax.f32 %v1377, 0.0
    %v1436 = vmax.f32 %v1382, 0.0
    %v1437 = vmax.f32 %v1387, 0.0
    %v1438 = vmax.f32 %v1392, 0.0
    %v1439 = vmax.f32 %v1397, 0.0
    %v1440 = vmax.f32 %v1402, 0.0
    %v1441 = vmax.f32 %v1407, 0.0
    %v1442 = vmax.f32 %v1412, 0.0
    %v1443 = vmax.f32 %v1417, 0.0
    %v1444 = vmax.f32 %v1422, 0.0
    %v1445 = vmax.f32 %v1427, 0.0
    %vm1446 = vcmask 130048
    %v1448 = vsel %vm1446, %v1430, 0
    %v1451 = vsel %vm1446, %v1431, 0
    %v1454 = vsel %vm1446, %v1432, 0
    %v1457 = vsel %vm1446, %v1433, 0
    %v1460 = vsel %vm1446, %v1434, 0
    %v1463 = vsel %vm1446, %v1435, 0
    %v1466 = vsel %vm1446, %v1436, 0
    %v1469 = vsel %vm1446, %v1437, 0
    %v1472 = vsel %vm1446, %v1438, 0
    %v1475 = vsel %vm1446, %v1439, 0
    %v1478 = vsel %vm1446, %v1440, 0
    %v1481 = vsel %vm1446, %v1441, 0
    %v1484 = vsel %vm1446, %v1442, 0
    %v1487 = vsel %vm1446, %v1443, 0
    %v1490 = vsel %vm1446, %v1444, 0
    %v1493 = vsel %vm1446, %v1445, 0
    %1495 = vmatprep.subr.mxu0 0.0
    %1496 = vmatpush1.msra.mxu0 %v65
    %1497 = vmatprep.subr.mxu0 0.0
    %1498 = vmatpush1.msra.mxu0 %v66
    %1499 = vmatprep.subr.mxu0 0.0
    %1500 = vmatpush1.msra.mxu0 0.0
    %1501 = vmatprep.subr.mxu0 0.0
    %1502 = vmatpush1.msra.mxu0 0.0
    %1503 = vmatprep.subr.mxu0 0.0
    %1504 = vmatpush1.msra.mxu0 0.0
    %1505 = vmatprep.subr.mxu0 0.0
    %1506 = vmatpush1.msra.mxu0 0.0
    %1507 = vmatprep.subr.mxu0 0.0
    %1508 = vmatpush1.msra.mxu0 0.0
    %1509 = vmatprep.subr.mxu0 0.0
    %1510 = vmatpush1.msra.mxu0 0.0
    %1511 = vmatprep.subr.mxu0 0.0
    %1512 = vmatpush1.msra.mxu0 0.0
    %1513 = vmatprep.subr.mxu0 0.0
    %1514 = vmatpush1.msra.mxu0 0.0
    %1515 = vmatprep.subr.mxu0 0.0
    %1516 = vmatpush1.msra.mxu0 0.0
    %1517 = vmatprep.subr.mxu0 0.0
    %1518 = vmatpush1.msra.mxu0 0.0
    %1519 = vmatprep.subr.mxu0 0.0
    %1520 = vmatpush1.msra.mxu0 0.0
    %1521 = vmatprep.subr.mxu0 0.0
    %1522 = vmatpush1.msra.mxu0 0.0
    %1523 = vmatprep.subr.mxu0 0.0
    %1524 = vmatpush1.msra.mxu0 0.0
    %1525 = vmatprep.subr.mxu0 0.0
    %1526 = vmatpush1.msra.mxu0 0.0
    %1527 = vmatprep.subr.mxu0 0.0
    %1528 = vmatpush1.msra.mxu0 0.0
    %1529 = vmatprep.subr.mxu0 0.0
    %1530 = vmatpush1.msra.mxu0 0.0
    %1531 = vmatprep.subr.mxu0 0.0
    %1532 = vmatpush1.msra.mxu0 0.0
    %1533 = vmatprep.subr.mxu0 0.0
    %1534 = vmatpush1.msra.mxu0 0.0
    %1535 = vmatprep.subr.mxu0 0.0
    %1536 = vmatpush1.msra.mxu0 0.0
    %1537 = vmatprep.subr.mxu0 0.0
    %1538 = vmatpush1.msra.mxu0 0.0
    %1539 = vmatprep.subr.mxu0 0.0
    %1540 = vmatpush1.msra.mxu0 0.0
    %1541 = vmatprep.subr.mxu0 0.0
    %1542 = vmatpush1.msra.mxu0 0.0
    %1543 = vmatprep.subr.mxu0 0.0
    %1544 = vmatpush1.msra.mxu0 0.0
    %1545 = vmatprep.subr.mxu0 0.0
    %1546 = vmatpush1.msra.mxu0 0.0
    %1547 = vmatprep.subr.mxu0 0.0
    %1548 = vmatpush1.msra.mxu0 0.0
    %1549 = vmatprep.subr.mxu0 0.0
    %1550 = vmatpush1.msra.mxu0 0.0
    %1551 = vmatprep.subr.mxu0 0.0
    %1552 = vmatpush1.msra.mxu0 0.0
    %1553 = vmatprep.subr.mxu0 0.0
    %1554 = vmatpush1.msra.mxu0 0.0
    %1555 = vmatprep.subr.mxu0 0.0
    %1556 = vmatpush1.msra.mxu0 0.0
    %1557 = vmatprep.subr.mxu0 0.0
    %1558 = vmatpush1.msra.mxu0 0.0
    %1559 = vmatprep.mubr.f32.mxu0 0.0
    %1560 = vmatmul.mubr.f32.gmra.mrb[0].mxu0 %v1448
    %v1561 = vpop.f32.mrb[0].mxu0
    %v1562 = vadd.f32 0.0, %v1561
    %v1563 = vpop.f32.mrb[0].mxu0
    %1564 = vmatprep.mubr.f32.mxu0 0.0
    %1565 = vmatmul.mubr.f32.gmra.mrb[0].mxu0 %v1451
    %v1566 = vpop.f32.mrb[0].mxu0
    %v1567 = vadd.f32 0.0, %v1566
    %v1568 = vpop.f32.mrb[0].mxu0
    %1569 = vmatprep.mubr.f32.mxu0 0.0
    %1570 = vmatmul.mubr.f32.gmra.mrb[0].mxu0 %v1454
    %v1571 = vpop.f32.mrb[0].mxu0
    %v1572 = vadd.f32 0.0, %v1571
    %v1573 = vpop.f32.mrb[0].mxu0
    %1574 = vmatprep.mubr.f32.mxu0 0.0
    %1575 = vmatmul.mubr.f32.gmra.mrb[0].mxu0 %v1457
    %v1576 = vpop.f32.mrb[0].mxu0
    %v1577 = vadd.f32 0.0, %v1576
    %v1578 = vpop.f32.mrb[0].mxu0
    %1579 = vmatprep.mubr.f32.mxu0 0.0
    %1580 = vmatmul.mubr.f32.gmra.mrb[0].mxu0 %v1460
    %v1581 = vpop.f32.mrb[0].mxu0
    %v1582 = vadd.f32 0.0, %v1581
    %v1583 = vpop.f32.mrb[0].mxu0
    %1584 = vmatprep.mubr.f32.mxu0 0.0
    %1585 = vmatmul.mubr.f32.gmra.mrb[0].mxu0 %v1463
    %v1586 = vpop.f32.mrb[0].mxu0
    %v1587 = vadd.f32 0.0, %v1586
    %v1588 = vpop.f32.mrb[0].mxu0
    %1589 = vmatprep.mubr.f32.mxu0 0.0
    %1590 = vmatmul.mubr.f32.gmra.mrb[0].mxu0 %v1466
    %v1591 = vpop.f32.mrb[0].mxu0
    %v1592 = vadd.f32 0.0, %v1591
    %v1593 = vpop.f32.mrb[0].mxu0
    %1594 = vmatprep.mubr.f32.mxu0 0.0
    %1595 = vmatmul.mubr.f32.gmra.mrb[0].mxu0 %v1469
    %v1596 = vpop.f32.mrb[0].mxu0
    %v1597 = vadd.f32 0.0, %v1596
    %v1598 = vpop.f32.mrb[0].mxu0
    %1599 = vmatprep.mubr.f32.mxu0 0.0
    %1600 = vmatmul.mubr.f32.gmra.mrb[0].mxu0 %v1472
    %v1601 = vpop.f32.mrb[0].mxu0
    %v1602 = vadd.f32 0.0, %v1601
    %v1603 = vpop.f32.mrb[0].mxu0
    %1604 = vmatprep.mubr.f32.mxu0 0.0
    %1605 = vmatmul.mubr.f32.gmra.mrb[0].mxu0 %v1475
    %v1606 = vpop.f32.mrb[0].mxu0
    %v1607 = vadd.f32 0.0, %v1606
    %v1608 = vpop.f32.mrb[0].mxu0
    %1609 = vmatprep.mubr.f32.mxu0 0.0
    %1610 = vmatmul.mubr.f32.gmra.mrb[0].mxu0 %v1478
    %v1611 = vpop.f32.mrb[0].mxu0
    %v1612 = vadd.f32 0.0, %v1611
    %v1613 = vpop.f32.mrb[0].mxu0
    %1614 = vmatprep.mubr.f32.mxu0 0.0
    %1615 = vmatmul.mubr.f32.gmra.mrb[0].mxu0 %v1481
    %v1616 = vpop.f32.mrb[0].mxu0
    %v1617 = vadd.f32 0.0, %v1616
    %v1618 = vpop.f32.mrb[0].mxu0
    %1619 = vmatprep.mubr.f32.mxu0 0.0
    %1620 = vmatmul.mubr.f32.gmra.mrb[0].mxu0 %v1484
    %v1621 = vpop.f32.mrb[0].mxu0
    %v1622 = vadd.f32 0.0, %v1621
    %v1623 = vpop.f32.mrb[0].mxu0
    %1624 = vmatprep.mubr.f32.mxu0 0.0
    %1625 = vmatmul.mubr.f32.gmra.mrb[0].mxu0 %v1487
    %v1626 = vpop.f32.mrb[0].mxu0
    %v1627 = vadd.f32 0.0, %v1626
    %v1628 = vpop.f32.mrb[0].mxu0
    %1629 = vmatprep.mubr.f32.mxu0 0.0
    %1630 = vmatmul.mubr.f32.gmra.mrb[0].mxu0 %v1490
    %v1631 = vpop.f32.mrb[0].mxu0
    %v1632 = vadd.f32 0.0, %v1631
    %v1633 = vpop.f32.mrb[0].mxu0
    %1634 = vmatprep.mubr.f32.mxu0 0.0
    %1635 = vmatmul.mubr.f32.gmra.mrb[0].mxu0 %v1493
    %v1636 = vpop.f32.mrb[0].mxu0
    %v1637 = vadd.f32 0.0, %v1636
    %v1638 = vpop.f32.mrb[0].mxu0
    %1639 = vdwg.mxu0
    %1640 = vmatprep.subr.mxu0 0.0
    %1641 = vmatpush1.msra.mxu0 %v1562
    %1642 = vmatprep.subr.mxu0 0.0
    %1643 = vmatpush1.msra.mxu0 %v1567
    %1644 = vmatprep.subr.mxu0 0.0
    %1645 = vmatpush1.msra.mxu0 %v1572
    %1646 = vmatprep.subr.mxu0 0.0
    %1647 = vmatpush1.msra.mxu0 %v1577
    %1648 = vmatprep.subr.mxu0 0.0
    %1649 = vmatpush1.msra.mxu0 %v1582
    %1650 = vmatprep.subr.mxu0 0.0
    %1651 = vmatpush1.msra.mxu0 %v1587
    %1652 = vmatprep.subr.mxu0 0.0
    %1653 = vmatpush1.msra.mxu0 %v1592
    %1654 = vmatprep.subr.mxu0 0.0
    %1655 = vmatpush1.msra.mxu0 %v1597
    %1656 = vmatprep.subr.mxu0 0.0
    %1657 = vmatpush1.msra.mxu0 %v1602
    %1658 = vmatprep.subr.mxu0 0.0
    %1659 = vmatpush1.msra.mxu0 %v1607
    %1660 = vmatprep.subr.mxu0 0.0
    %1661 = vmatpush1.msra.mxu0 %v1612
    %1662 = vmatprep.subr.mxu0 0.0
    %1663 = vmatpush1.msra.mxu0 %v1617
    %1664 = vmatprep.subr.mxu0 0.0
    %1665 = vmatpush1.msra.mxu0 %v1622
    %1666 = vmatprep.subr.mxu0 0.0
    %1667 = vmatpush1.msra.mxu0 %v1627
    %1668 = vmatprep.subr.mxu0 0.0
    %1669 = vmatpush1.msra.mxu0 %v1632
    %1670 = vmatprep.subr.mxu0 0.0
    %1671 = vmatpush1.msra.mxu0 %v1637
    %1672 = vmatprep.subr.mxu0 0.0
    %1673 = vmatpush1.msra.mxu0 0.0
    %1674 = vmatprep.subr.mxu0 0.0
    %1675 = vmatpush1.msra.mxu0 0.0
    %1676 = vmatprep.subr.mxu0 0.0
    %1677 = vmatpush1.msra.mxu0 0.0
    %1678 = vmatprep.subr.mxu0 0.0
    %1679 = vmatpush1.msra.mxu0 0.0
    %1680 = vmatprep.subr.mxu0 0.0
    %1681 = vmatpush1.msra.mxu0 0.0
    %1682 = vmatprep.subr.mxu0 0.0
    %1683 = vmatpush1.msra.mxu0 0.0
    %1684 = vmatprep.subr.mxu0 0.0
    %1685 = vmatpush1.msra.mxu0 0.0
    %1686 = vmatprep.subr.mxu0 0.0
    %1687 = vmatpush1.msra.mxu0 0.0
    %1688 = vmatprep.subr.mxu0 0.0
    %1689 = vmatpush1.msra.mxu0 0.0
    %1690 = vmatprep.subr.mxu0 0.0
    %1691 = vmatpush1.msra.mxu0 0.0
    %1692 = vmatprep.subr.mxu0 0.0
    %1693 = vmatpush1.msra.mxu0 0.0
    %1694 = vmatprep.subr.mxu0 0.0
    %1695 = vmatpush1.msra.mxu0 0.0
    %1696 = vmatprep.subr.mxu0 0.0
    %1697 = vmatpush1.msra.mxu0 0.0
    %1698 = vmatprep.subr.mxu0 0.0
    %1699 = vmatpush1.msra.mxu0 0.0
    %1700 = vmatprep.subr.mxu0 0.0
    %1701 = vmatpush1.msra.mxu0 0.0
    %1702 = vmatprep.subr.mxu0 0.0
    %1703 = vmatpush1.msra.mxu0 0.0
    %1704 = vmatprep.mubr.f32.mxu0 0.0
    %1705 = vmatmul.mubr.f32.gmra.mrb[0].mxu0 %v36
    %v1706 = vpop.f32.mrb[0].mxu0
    %v1707 = vadd.f32 0.0, %v1706
    %v1708 = vpop.f32.mrb[0].mxu0
    %1709 = vmatprep.mubr.f32.mxu0 0.0
    %1710 = vmatmul.mubr.f32.gmra.mrb[0].mxu0 %v37
    %v1711 = vpop.f32.mrb[0].mxu0
    %v1712 = vadd.f32 0.0, %v1711
    %v1713 = vpop.f32.mrb[0].mxu0
    %1714 = vmatprep.mubr.f32.mxu0 0.0
    %1715 = vmatmul.mubr.f32.gmra.mrb[0].mxu0 %v38
    %v1716 = vpop.f32.mrb[0].mxu0
    %v1717 = vadd.f32 0.0, %v1716
    %v1718 = vpop.f32.mrb[0].mxu0
    %1719 = vmatprep.mubr.f32.mxu0 0.0
    %1720 = vmatmul.mubr.f32.gmra.mrb[0].mxu0 %v39
    %v1721 = vpop.f32.mrb[0].mxu0
    %v1722 = vadd.f32 0.0, %v1721
    %v1723 = vpop.f32.mrb[0].mxu0
    %1724 = vmatprep.mubr.f32.mxu0 0.0
    %1725 = vmatmul.mubr.f32.gmra.mrb[0].mxu0 %v40
    %v1726 = vpop.f32.mrb[0].mxu0
    %v1727 = vadd.f32 0.0, %v1726
    %v1728 = vpop.f32.mrb[0].mxu0
    %1729 = vmatprep.mubr.f32.mxu0 0.0
    %1730 = vmatmul.mubr.f32.gmra.mrb[0].mxu0 %v41
    %v1731 = vpop.f32.mrb[0].mxu0
    %v1732 = vadd.f32 0.0, %v1731
    %v1733 = vpop.f32.mrb[0].mxu0
    %1734 = vmatprep.mubr.f32.mxu0 0.0
    %1735 = vmatmul.mubr.f32.gmra.mrb[0].mxu0 %v42
    %v1736 = vpop.f32.mrb[0].mxu0
    %v1737 = vadd.f32 0.0, %v1736
    %v1738 = vpop.f32.mrb[0].mxu0
    %1739 = vmatprep.mubr.f32.mxu0 0.0
    %1740 = vmatmul.mubr.f32.gmra.mrb[0].mxu0 %v43
    %v1741 = vpop.f32.mrb[0].mxu0
    %v1742 = vadd.f32 0.0, %v1741
    %v1743 = vpop.f32.mrb[0].mxu0
    %1744 = vmatprep.mubr.f32.mxu0 0.0
    %1745 = vmatmul.mubr.f32.gmra.mrb[0].mxu0 %v44
    %v1746 = vpop.f32.mrb[0].mxu0
    %v1747 = vadd.f32 0.0, %v1746
    %v1748 = vpop.f32.mrb[0].mxu0
    %1749 = vmatprep.mubr.f32.mxu0 0.0
    %1750 = vmatmul.mubr.f32.gmra.mrb[0].mxu0 %v45
    %v1751 = vpop.f32.mrb[0].mxu0
    %v1752 = vadd.f32 0.0, %v1751
    %v1753 = vpop.f32.mrb[0].mxu0
    %1754 = vmatprep.mubr.f32.mxu0 0.0
    %1755 = vmatmul.mubr.f32.gmra.mrb[0].mxu0 %v46
    %v1756 = vpop.f32.mrb[0].mxu0
    %v1757 = vadd.f32 0.0, %v1756
    %v1758 = vpop.f32.mrb[0].mxu0
    %1759 = vmatprep.mubr.f32.mxu0 0.0
    %1760 = vmatmul.mubr.f32.gmra.mrb[0].mxu0 %v47
    %v1761 = vpop.f32.mrb[0].mxu0
    %v1762 = vadd.f32 0.0, %v1761
    %v1763 = vpop.f32.mrb[0].mxu0
    %1764 = vmatprep.mubr.f32.mxu0 0.0
    %1765 = vmatmul.mubr.f32.gmra.mrb[0].mxu0 %v48
    %v1766 = vpop.f32.mrb[0].mxu0
    %v1767 = vadd.f32 0.0, %v1766
    %v1768 = vpop.f32.mrb[0].mxu0
    %1769 = vmatprep.mubr.f32.mxu0 0.0
    %1770 = vmatmul.mubr.f32.gmra.mrb[0].mxu0 %v49
    %v1771 = vpop.f32.mrb[0].mxu0
    %v1772 = vadd.f32 0.0, %v1771
    %v1773 = vpop.f32.mrb[0].mxu0
    %1774 = vmatprep.mubr.f32.mxu0 0.0
    %1775 = vmatmul.mubr.f32.gmra.mrb[0].mxu0 %v50
    %v1776 = vpop.f32.mrb[0].mxu0
    %v1777 = vadd.f32 0.0, %v1776
    %v1778 = vpop.f32.mrb[0].mxu0
    %1779 = vmatprep.mubr.f32.mxu0 0.0
    %1780 = vmatmul.mubr.f32.gmra.mrb[0].mxu0 %v51
    %v1781 = vpop.f32.mrb[0].mxu0
    %v1782 = vadd.f32 0.0, %v1781
    %v1783 = vpop.f32.mrb[0].mxu0
    %1784 = vdwg.mxu0
    %v1785 = vld [vmem:[%s3] sm:$0xff]
    %v1786 = vld [vmem:[%s3 + $0x8] sm:$0xff]
    %v1787 = vld [vmem:[%s3 + $0x10] sm:$0xff]
    %v1788 = vld [vmem:[%s3 + $0x18] sm:$0xff]
    %v1789 = vld [vmem:[%s3 + $0x20] sm:$0xff]
    %v1790 = vld [vmem:[%s3 + $0x28] sm:$0xff]
    %v1791 = vld [vmem:[%s3 + $0x30] sm:$0xff]
    %v1792 = vld [vmem:[%s3 + $0x38] sm:$0xff]
    %v1793 = vld [vmem:[%s3 + $0x40] sm:$0xff]
    %v1794 = vld [vmem:[%s3 + $0x48] sm:$0xff]
    %v1795 = vld [vmem:[%s3 + $0x50] sm:$0xff]
    %v1796 = vld [vmem:[%s3 + $0x58] sm:$0xff]
    %v1797 = vld [vmem:[%s3 + $0x60] sm:$0xff]
    %v1798 = vld [vmem:[%s3 + $0x68] sm:$0xff]
    %v1799 = vld [vmem:[%s3 + $0x70] sm:$0xff]
    %v1800 = vld [vmem:[%s3 + $0x78] sm:$0xff]
    %v1801 = vmul.f32 %v1707, 1.442695
    %v1802 = vpow.pop %v1801
    %v1803 = vmul.f32 %v1712, 1.442695
    %v1804 = vpow.pop %v1803
    %v1805 = vmul.f32 %v1717, 1.442695
    %v1806 = vpow.pop %v1805
    %v1807 = vmul.f32 %v1722, 1.442695
    %v1808 = vpow.pop %v1807
    %v1809 = vmul.f32 %v1727, 1.442695
    %v1810 = vpow.pop %v1809
    %v1811 = vmul.f32 %v1732, 1.442695
    %v1812 = vpow.pop %v1811
    %v1813 = vmul.f32 %v1737, 1.442695
    %v1814 = vpow.pop %v1813
    %v1815 = vmul.f32 %v1742, 1.442695
    %v1816 = vpow.pop %v1815
    %v1817 = vmul.f32 %v1747, 1.442695
    %v1818 = vpow.pop %v1817
    %v1819 = vmul.f32 %v1752, 1.442695
    %v1820 = vpow.pop %v1819
    %v1821 = vmul.f32 %v1757, 1.442695
    %v1822 = vpow.pop %v1821
    %v1823 = vmul.f32 %v1762, 1.442695
    %v1824 = vpow.pop %v1823
    %v1825 = vmul.f32 %v1767, 1.442695
    %v1826 = vpow.pop %v1825
    %v1827 = vmul.f32 %v1772, 1.442695
    %v1828 = vpow.pop %v1827
    %v1829 = vmul.f32 %v1777, 1.442695
    %v1830 = vpow.pop %v1829
    %v1831 = vmul.f32 %v1782, 1.442695
    %v1832 = vpow.pop %v1831
    %1849 = vrot.lane.b32.xlu0 %v1802, 120
    %v1850 = vpop.permute.xlu0 %1849
    %1851 = vrot.lane.b32.xlu0 %v1804, 120
    %v1852 = vpop.permute.xlu0 %1851
    %1853 = vrot.lane.b32.xlu0 %v1806, 120
    %v1854 = vpop.permute.xlu0 %1853
    %1855 = vrot.lane.b32.xlu0 %v1808, 120
    %v1856 = vpop.permute.xlu0 %1855
    %1857 = vrot.lane.b32.xlu0 %v1810, 120
    %v1858 = vpop.permute.xlu0 %1857
    %1859 = vrot.lane.b32.xlu0 %v1812, 120
    %v1860 = vpop.permute.xlu0 %1859
    %1861 = vrot.lane.b32.xlu0 %v1814, 120
    %v1862 = vpop.permute.xlu0 %1861
    %1863 = vrot.lane.b32.xlu0 %v1816, 120
    %v1864 = vpop.permute.xlu0 %1863
    %1865 = vrot.lane.b32.xlu0 %v1818, 120
    %v1866 = vpop.permute.xlu0 %1865
    %1867 = vrot.lane.b32.xlu0 %v1820, 120
    %v1868 = vpop.permute.xlu0 %1867
    %1869 = vrot.lane.b32.xlu0 %v1822, 120
    %v1870 = vpop.permute.xlu0 %1869
    %1871 = vrot.lane.b32.xlu0 %v1824, 120
    %v1872 = vpop.permute.xlu0 %1871
    %1873 = vrot.lane.b32.xlu0 %v1826, 120
    %v1874 = vpop.permute.xlu0 %1873
    %1875 = vrot.lane.b32.xlu0 %v1828, 120
    %v1876 = vpop.permute.xlu0 %1875
    %1877 = vrot.lane.b32.xlu0 %v1830, 120
    %v1878 = vpop.permute.xlu0 %1877
    %1879 = vrot.lane.b32.xlu0 %v1832, 120
    %v1880 = vpop.permute.xlu0 %1879
    %v1897 = vmul.f32 %v1785, %v1850
    %v1898 = vmul.f32 %v1786, %v1852
    %v1899 = vmul.f32 %v1787, %v1854
    %v1900 = vmul.f32 %v1788, %v1856
    %v1901 = vmul.f32 %v1789, %v1858
    %v1902 = vmul.f32 %v1790, %v1860
    %v1903 = vmul.f32 %v1791, %v1862
    %v1904 = vmul.f32 %v1792, %v1864
    %v1905 = vmul.f32 %v1793, %v1866
    %v1906 = vmul.f32 %v1794, %v1868
    %v1907 = vmul.f32 %v1795, %v1870
    %v1908 = vmul.f32 %v1796, %v1872
    %v1909 = vmul.f32 %v1797, %v1874
    %v1910 = vmul.f32 %v1798, %v1876
    %v1911 = vmul.f32 %v1799, %v1878
    %v1912 = vmul.f32 %v1800, %v1880
    %v1913 = vadd.f32 %v1897, %v1707
    %v1914 = vadd.f32 %v1898, %v1712
    %v1915 = vadd.f32 %v1899, %v1717
    %v1916 = vadd.f32 %v1900, %v1722
    %v1917 = vadd.f32 %v1901, %v1727
    %v1918 = vadd.f32 %v1902, %v1732
    %v1919 = vadd.f32 %v1903, %v1737
    %v1920 = vadd.f32 %v1904, %v1742
    %v1921 = vadd.f32 %v1905, %v1747
    %v1922 = vadd.f32 %v1906, %v1752
    %v1923 = vadd.f32 %v1907, %v1757
    %v1924 = vadd.f32 %v1908, %v1762
    %v1925 = vadd.f32 %v1909, %v1767
    %v1926 = vadd.f32 %v1910, %v1772
    %v1927 = vadd.f32 %v1911, %v1777
    %v1928 = vadd.f32 %v1912, %v1782
    %vm1929 = vcmask 64512
    %v1931 = vsel %vm1929, %v1913, 0
    %v1934 = vsel %vm1929, %v1914, 0
    %v1937 = vsel %vm1929, %v1915, 0
    %v1940 = vsel %vm1929, %v1916, 0
    %v1943 = vsel %vm1929, %v1917, 0
    %v1946 = vsel %vm1929, %v1918, 0
    %v1949 = vsel %vm1929, %v1919, 0
    %v1952 = vsel %vm1929, %v1920, 0
    %v1955 = vsel %vm1929, %v1921, 0
    %v1958 = vsel %vm1929, %v1922, 0
    %v1961 = vsel %vm1929, %v1923, 0
    %v1964 = vsel %vm1929, %v1924, 0
    %v1967 = vsel %vm1929, %v1925, 0
    %v1970 = vsel %vm1929, %v1926, 0
    %v1973 = vsel %vm1929, %v1927, 0
    %v1976 = vsel %vm1929, %v1928, 0
    %1978 = vmatprep.subr.mxu0 0.0
    %1979 = vmatpush1.xpose.msra.mxu0 %v1931
    %1980 = vmatprep.subr.mxu0 0.0
    %1981 = vmatpush1.xpose.msra.mxu0 %v1934
    %1982 = vmatprep.subr.mxu0 0.0
    %1983 = vmatpush1.xpose.msra.mxu0 %v1937
    %1984 = vmatprep.subr.mxu0 0.0
    %1985 = vmatpush1.xpose.msra.mxu0 %v1940
    %1986 = vmatprep.subr.mxu0 0.0
    %1987 = vmatpush1.xpose.msra.mxu0 %v1943
    %1988 = vmatprep.subr.mxu0 0.0
    %1989 = vmatpush1.xpose.msra.mxu0 %v1946
    %1990 = vmatprep.subr.mxu0 0.0
    %1991 = vmatpush1.xpose.msra.mxu0 %v1949
    %1992 = vmatprep.subr.mxu0 0.0
    %1993 = vmatpush1.xpose.msra.mxu0 %v1952
    %1994 = vmatprep.subr.mxu0 0.0
    %1995 = vmatpush1.xpose.msra.mxu0 %v1955
    %1996 = vmatprep.subr.mxu0 0.0
    %1997 = vmatpush1.xpose.msra.mxu0 %v1958
    %1998 = vmatprep.subr.mxu0 0.0
    %1999 = vmatpush1.xpose.msra.mxu0 %v1961
    %2000 = vmatprep.subr.mxu0 0.0
    %2001 = vmatpush1.xpose.msra.mxu0 %v1964
    %2002 = vmatprep.subr.mxu0 0.0
    %2003 = vmatpush1.xpose.msra.mxu0 %v1967
    %2004 = vmatprep.subr.mxu0 0.0
    %2005 = vmatpush1.xpose.msra.mxu0 %v1970
    %2006 = vmatprep.subr.mxu0 0.0
    %2007 = vmatpush1.xpose.msra.mxu0 %v1973
    %2008 = vmatprep.subr.mxu0 0.0
    %2009 = vmatpush1.xpose.msra.mxu0 %v1976
    %2010 = vmatprep.subr.mxu0 0.0
    %2011 = vmatpush1.xpose.msra.mxu0 0.0
    %2012 = vmatprep.subr.mxu0 0.0
    %2013 = vmatpush1.xpose.msra.mxu0 0.0
    %2014 = vmatprep.subr.mxu0 0.0
    %2015 = vmatpush1.xpose.msra.mxu0 0.0
    %2016 = vmatprep.subr.mxu0 0.0
    %2017 = vmatpush1.xpose.msra.mxu0 0.0
    %2018 = vmatprep.subr.mxu0 0.0
    %2019 = vmatpush1.xpose.msra.mxu0 0.0
    %2020 = vmatprep.subr.mxu0 0.0
    %2021 = vmatpush1.xpose.msra.mxu0 0.0
    %2022 = vmatprep.subr.mxu0 0.0
    %2023 = vmatpush1.xpose.msra.mxu0 0.0
    %2024 = vmatprep.subr.mxu0 0.0
    %2025 = vmatpush1.xpose.msra.mxu0 0.0
    %2026 = vmatprep.subr.mxu0 0.0
    %2027 = vmatpush1.xpose.msra.mxu0 0.0
    %2028 = vmatprep.subr.mxu0 0.0
    %2029 = vmatpush1.xpose.msra.mxu0 0.0
    %2030 = vmatprep.subr.mxu0 0.0
    %2031 = vmatpush1.xpose.msra.mxu0 0.0
    %2032 = vmatprep.subr.mxu0 0.0
    %2033 = vmatpush1.xpose.msra.mxu0 0.0
    %2034 = vmatprep.subr.mxu0 0.0
    %2035 = vmatpush1.xpose.msra.mxu0 0.0
    %2036 = vmatprep.subr.mxu0 0.0
    %2037 = vmatpush1.xpose.msra.mxu0 0.0
    %2038 = vmatprep.subr.mxu0 0.0
    %2039 = vmatpush1.xpose.msra.mxu0 0.0
    %2040 = vmatprep.subr.mxu0 0.0
    %2041 = vmatpush1.xpose.msra.mxu0 0.0
    %2042 = vmatprep.mubr.f32.mxu0 0.0
    %2043 = vmatmul.mubr.f32.gmra.mrb[0].mxu0 %v1931
    %v2044 = vpop.f32.mrb[0].mxu0
    %v2045 = vadd.f32 0.0, %v2044
    %v2046 = vpop.f32.mrb[0].mxu0
    %2047 = vmatprep.mubr.f32.mxu0 0.0
    %2048 = vmatmul.mubr.f32.gmra.mrb[0].mxu0 %v1934
    %v2049 = vpop.f32.mrb[0].mxu0
    %v2050 = vadd.f32 0.0, %v2049
    %v2051 = vpop.f32.mrb[0].mxu0
    %2052 = vmatprep.mubr.f32.mxu0 0.0
    %2053 = vmatmul.mubr.f32.gmra.mrb[0].mxu0 %v1937
    %v2054 = vpop.f32.mrb[0].mxu0
    %v2055 = vadd.f32 0.0, %v2054
    %v2056 = vpop.f32.mrb[0].mxu0
    %2057 = vmatprep.mubr.f32.mxu0 0.0
    %2058 = vmatmul.mubr.f32.gmra.mrb[0].mxu0 %v1940
    %v2059 = vpop.f32.mrb[0].mxu0
    %v2060 = vadd.f32 0.0, %v2059
    %v2061 = vpop.f32.mrb[0].mxu0
    %2062 = vmatprep.mubr.f32.mxu0 0.0
    %2063 = vmatmul.mubr.f32.gmra.mrb[0].mxu0 %v1943
    %v2064 = vpop.f32.mrb[0].mxu0
    %v2065 = vadd.f32 0.0, %v2064
    %v2066 = vpop.f32.mrb[0].mxu0
    %2067 = vmatprep.mubr.f32.mxu0 0.0
    %2068 = vmatmul.mubr.f32.gmra.mrb[0].mxu0 %v1946
    %v2069 = vpop.f32.mrb[0].mxu0
    %v2070 = vadd.f32 0.0, %v2069
    %v2071 = vpop.f32.mrb[0].mxu0
    %2072 = vmatprep.mubr.f32.mxu0 0.0
    %2073 = vmatmul.mubr.f32.gmra.mrb[0].mxu0 %v1949
    %v2074 = vpop.f32.mrb[0].mxu0
    %v2075 = vadd.f32 0.0, %v2074
    %v2076 = vpop.f32.mrb[0].mxu0
    %2077 = vmatprep.mubr.f32.mxu0 0.0
    %2078 = vmatmul.mubr.f32.gmra.mrb[0].mxu0 %v1952
    %v2079 = vpop.f32.mrb[0].mxu0
    %v2080 = vadd.f32 0.0, %v2079
    %v2081 = vpop.f32.mrb[0].mxu0
    %2082 = vmatprep.mubr.f32.mxu0 0.0
    %2083 = vmatmul.mubr.f32.gmra.mrb[0].mxu0 %v1955
    %v2084 = vpop.f32.mrb[0].mxu0
    %v2085 = vadd.f32 0.0, %v2084
    %v2086 = vpop.f32.mrb[0].mxu0
    %2087 = vmatprep.mubr.f32.mxu0 0.0
    %2088 = vmatmul.mubr.f32.gmra.mrb[0].mxu0 %v1958
    %v2089 = vpop.f32.mrb[0].mxu0
    %v2090 = vadd.f32 0.0, %v2089
    %v2091 = vpop.f32.mrb[0].mxu0
    %2092 = vmatprep.mubr.f32.mxu0 0.0
    %2093 = vmatmul.mubr.f32.gmra.mrb[0].mxu0 %v1961
    %v2094 = vpop.f32.mrb[0].mxu0
    %v2095 = vadd.f32 0.0, %v2094
    %v2096 = vpop.f32.mrb[0].mxu0
    %2097 = vmatprep.mubr.f32.mxu0 0.0
    %2098 = vmatmul.mubr.f32.gmra.mrb[0].mxu0 %v1964
    %v2099 = vpop.f32.mrb[0].mxu0
    %v2100 = vadd.f32 0.0, %v2099
    %v2101 = vpop.f32.mrb[0].mxu0
    %2102 = vmatprep.mubr.f32.mxu0 0.0
    %2103 = vmatmul.mubr.f32.gmra.mrb[0].mxu0 %v1967
    %v2104 = vpop.f32.mrb[0].mxu0
    %v2105 = vadd.f32 0.0, %v2104
    %v2106 = vpop.f32.mrb[0].mxu0
    %2107 = vmatprep.mubr.f32.mxu0 0.0
    %2108 = vmatmul.mubr.f32.gmra.mrb[0].mxu0 %v1970
    %v2109 = vpop.f32.mrb[0].mxu0
    %v2110 = vadd.f32 0.0, %v2109
    %v2111 = vpop.f32.mrb[0].mxu0
    %2112 = vmatprep.mubr.f32.mxu0 0.0
    %2113 = vmatmul.mubr.f32.gmra.mrb[0].mxu0 %v1973
    %v2114 = vpop.f32.mrb[0].mxu0
    %v2115 = vadd.f32 0.0, %v2114
    %v2116 = vpop.f32.mrb[0].mxu0
    %2117 = vmatprep.mubr.f32.mxu0 0.0
    %2118 = vmatmul.mubr.f32.gmra.mrb[0].mxu0 %v1976
    %v2119 = vpop.f32.mrb[0].mxu0
    %v2120 = vadd.f32 0.0, %v2119
    %v2121 = vpop.f32.mrb[0].mxu0
    %2122 = vdwg.mxu0
    %2123 = vst [vmem:[#allocation2] sm:$0xff] %v2045
    %2124 = vst [vmem:[#allocation2 + $0x8] sm:$0xff] %v2050
    %2125 = vst [vmem:[#allocation2 + $0x10] sm:$0xff] %v2055
    %2126 = vst [vmem:[#allocation2 + $0x18] sm:$0xff] %v2060
    %2127 = vst [vmem:[#allocation2 + $0x20] sm:$0xff] %v2065
    %2128 = vst [vmem:[#allocation2 + $0x28] sm:$0xff] %v2070
    %2129 = vst [vmem:[#allocation2 + $0x30] sm:$0xff] %v2075
    %2130 = vst [vmem:[#allocation2 + $0x38] sm:$0xff] %v2080
    %2131 = vst [vmem:[#allocation2 + $0x40] sm:$0xff] %v2085
    %2132 = vst [vmem:[#allocation2 + $0x48] sm:$0xff] %v2090
    %2133 = vst [vmem:[#allocation2 + $0x50] sm:$0xff] %v2095
    %2134 = vst [vmem:[#allocation2 + $0x58] sm:$0xff] %v2100
    %2135 = vst [vmem:[#allocation2 + $0x60] sm:$0xff] %v2105
    %2136 = vst [vmem:[#allocation2 + $0x68] sm:$0xff] %v2110
    %2137 = vst [vmem:[#allocation2 + $0x70] sm:$0xff] %v2115
    %2138 = vst [vmem:[#allocation2 + $0x78] sm:$0xff] %v2120
    %2139 = vst.msk [vmem:[%s5] sm:$0xff] %vm1446, %v1707
    %2140 = vst.msk [vmem:[%s5 + $0x8] sm:$0xff] %vm1446, %v1712
    %2141 = vst.msk [vmem:[%s5 + $0x10] sm:$0xff] %vm1446, %v1717
    %2142 = vst.msk [vmem:[%s5 + $0x18] sm:$0xff] %vm1446, %v1722
    %2143 = vst.msk [vmem:[%s5 + $0x20] sm:$0xff] %vm1446, %v1727
    %2144 = vst.msk [vmem:[%s5 + $0x28] sm:$0xff] %vm1446, %v1732
    %2145 = vst.msk [vmem:[%s5 + $0x30] sm:$0xff] %vm1446, %v1737
    %2146 = vst.msk [vmem:[%s5 + $0x38] sm:$0xff] %vm1446, %v1742
    %2147 = vst.msk [vmem:[%s5 + $0x40] sm:$0xff] %vm1446, %v1747
    %2148 = vst.msk [vmem:[%s5 + $0x48] sm:$0xff] %vm1446, %v1752
    %2149 = vst.msk [vmem:[%s5 + $0x50] sm:$0xff] %vm1446, %v1757
    %2150 = vst.msk [vmem:[%s5 + $0x58] sm:$0xff] %vm1446, %v1762
    %2151 = vst.msk [vmem:[%s5 + $0x60] sm:$0xff] %vm1446, %v1767
    %2152 = vst.msk [vmem:[%s5 + $0x68] sm:$0xff] %vm1446, %v1772
    %2153 = vst.msk [vmem:[%s5 + $0x70] sm:$0xff] %vm1446, %v1777
    %2154 = vst.msk [vmem:[%s5 + $0x78] sm:$0xff] %vm1446, %v1782
    // Predicated region
    $region18: #{tpu_custom_call.1} parent=1 // pred_check
      _
    $region19: #{tpu_custom_call.1} parent=1 // pred_check_branch
      %2156 = sbr.rel (0) target = $region21
    $region20: #{tpu_custom_call.1} parent=1 // pred_region
      %s2158 = ssub.s32 2048, 2048
      %2159 = vsyncadd [#allocation3], %s2158
      %s2160 = sshll.u32 [#allocation2], 4
      %s2161 = int_to_ptr.vmem [resolvable:$true] %s2160
      %2166 = dma.vmem_to_hbm [thread:$0]  %s2161, 2048, %s4, [#allocation3], 128, 128, 8
    $region21: #{tpu_custom_call.1} parent=1 // pred_fallthru
      _
    // Predicated region
    $region22: #{tpu_custom_call.1} parent=1 // pred_check
      _
    $region23: #{tpu_custom_call.1} parent=1 // pred_check_branch
      %2168 = sbr.rel (0) target = $region25
    $region24: #{tpu_custom_call.1} parent=1 // pred_region
      _
    $region25: #{tpu_custom_call.1} parent=1 // pred_fallthru
      _
    // Predicated region
    $region26: #{tpu_custom_call.1} parent=1 // pred_check
      _
    $region27: #{tpu_custom_call.1} parent=1 // pred_check_branch
      %2170 = sbr.rel (0) target = $region29
    $region28: #{tpu_custom_call.1} parent=1 // pred_region
      %2171 = dma.done [#allocation3], 2048
    $region29: #{tpu_custom_call.1} parent=1 // pred_fallthru
      _
    // Predicated region
    $region30: #{tpu_custom_call.1} parent=1 // pred_check
      _
    $region31: #{tpu_custom_call.1} parent=1 // pred_check_branch
      %2173 = sbr.rel (0) target = $region33
    $region32: #{tpu_custom_call.1} parent=1 // pred_region
      _
    $region33: #{tpu_custom_call.1} parent=1 // pred_fallthru
      _
    %2174 = vsyncpa [#allocation3], 1

</llo_original>
